<compile_context>
chip_gen: v7x
topology: tpu7x:2x2x1
jax: 0.10.0
libtpu: 0.0.40
codegen_flags: <defaults>
</compile_context>

<pallas_src>
import functools

import jax
import jax.numpy as jnp
from jax import lax
from jax.experimental import pallas as pl
from jax.experimental.pallas import tpu as pltpu


HIDDEN = 20
_LANE = 128
# Per-batch-row VMEM footprint (f32): x tile lane-padded to 128 lanes, double
# buffered (2*512 B) + ~2x the sublane-padded (24, TILE_B) hidden intermediate
# (~192 B) + in-VMEM x^T staging (~32 B) + double-buffered (8, TILE_B) output
# tile (~64 B)  ->  ~1.3 KiB/row.  12288 rows ~ 15 MiB/step.
_DEFAULT_TILE_CAP = 12288


def _round_up(n, m):
    return ((n + m - 1) // m) * m


def qnetwork_kernel(x_ref, w1_ref, b1_ref, w2_ref, b2_ref, o_ref):
    # fc1 on the MXU, contracting the state_dim axis of both operands:
    #   (H, S) x (TILE_B, S)^T -> (H, TILE_B)   (batch ends up on the lane axis)
    # The operand "transpose" happens on the in-VMEM MXU/XLU path; no HBM-side
    # transpose of x is ever materialized.
    h = lax.dot_general(
        w1_ref[...], x_ref[...],
        dimension_numbers=(((1,), (1,)), ((), ())),
        preferred_element_type=jnp.float32,
    )
    h = jnp.maximum(h + b1_ref[...], 0.0)          # (H,1) bias broadcasts over lanes
    # fc2 (20 -> 1): VPU broadcast-multiply + cross-sublane (XLU) reduce instead
    # of a ~0.5%-utilized single-output-column MXU matmul.  b2 is an SMEM scalar.
    out = jnp.sum(h * w2_ref[...], axis=0, keepdims=True) + b2_ref[0]
    o_ref[...] = out.astype(o_ref.dtype)           # lane-dense (1, TILE_B) store


@functools.partial(jax.jit, static_argnames=("tile_b_cap", "small_batch_threshold"))
def qnetwork_forward(x, w1, b1, w2, b2, *,
                     tile_b_cap=_DEFAULT_TILE_CAP, small_batch_threshold=2048):
    """Critic forward pass.

    x : (B, state_dim) f32
    w1: (HIDDEN, state_dim)  -- torch fc1.weight layout
    b1: (HIDDEN, 1)          -- fc1.bias[:, None]
    w2: (HIDDEN, 1)          -- fc2.weight.T
    b2: (1,)                 -- fc2.bias
    returns (B, 1) f32
    """
    B, S = x.shape
    H = w1.shape[0]

    # Small-batch fallback: a single fused XLA expression beats the kernel-launch
    # / multi-dispatch path by an order of magnitude at tiny B (rollout steps).
    if B <= small_batch_threshold:
        h = jnp.maximum(
            jnp.dot(x, w1.T, precision=lax.Precision.HIGHEST) + b1.reshape(1, H),
            0.0)
        return jnp.dot(h, w2, precision=lax.Precision.HIGHEST) + b2.reshape(1, 1)

    # Tile / grid selection: biggest VMEM-budgeted tile, but keep the grid
    # length >= 2 and even so v7x's two TensorCores both get batch slices.
    num_tiles = max(pl.cdiv(B, tile_b_cap), 2)
    num_tiles += num_tiles % 2
    tile_b = _round_up(pl.cdiv(B, num_tiles), _LANE)   # batch sits on lanes in-kernel
    grid = (pl.cdiv(B, tile_b),)                        # boundary block is masked

    out_row = pl.pallas_call(
        qnetwork_kernel,
        out_shape=jax.ShapeDtypeStruct((1, B), jnp.float32),
        grid_spec=pltpu.PrefetchScalarGridSpec(
            num_scalar_prefetch=0,
            grid=grid,
            in_specs=[
                # x streamed untransposed, new block each step (auto double-buffered).
                pl.BlockSpec((tile_b, S), lambda i: (i, 0)),
                # Parameters: full-array blocks, constant index_map -> VMEM-resident.
                pl.BlockSpec((H, S), lambda i: (0, 0)),
                pl.BlockSpec((H, 1), lambda i: (0, 0)),
                pl.BlockSpec((H, 1), lambda i: (0, 0)),
                # b2: scalar in SMEM (no padded (8,128) VMEM block, no lane broadcast
                # from a single-lane vreg).
                pl.BlockSpec(memory_space=pltpu.MemorySpace.SMEM),
            ],
            out_specs=pl.BlockSpec((1, tile_b), lambda i: (0, i)),
        ),
        compiler_params=pltpu.CompilerParams(
            dimension_semantics=("parallel",),       # batch axis -> both v7x TCs
            vmem_limit_bytes=32 * 1024 * 1024,       # headroom over v5e's 16 MiB default
        ),
    )(x, w1, b1, w2, b2)

    # (1, B) -> (B, 1): a small relayout copy of B*4 bytes (not free on TPU, but
    # tiny next to the (B, S) read of x); kept to preserve the module's output shape.
    return out_row.reshape(B, 1)


def qnetwork_reference(x, w1, b1, w2, b2):
    """Plain-JAX reference, full f32 precision (same math as the PyTorch forward)."""
    h = jnp.maximum(
        jnp.dot(x, w1.T, precision=lax.Precision.HIGHEST) + b1.reshape(1, -1), 0.0)
    return jnp.dot(h, w2, precision=lax.Precision.HIGHEST) + b2.reshape(1, 1)


def init_qnetwork_params(key, state_dim, hidden=HIDDEN):
    """PyTorch nn.Linear default init (uniform +-1/sqrt(fan_in)), stored in the
    kernel layout: w1=(hidden,state_dim) [= torch fc1.weight], b1=(hidden,1),
    w2=(hidden,1) [= torch fc2.weight.T], b2=(1,)."""
    k1, k2, k3, k4 = jax.random.split(key, 4)
    lim1 = 1.0 / jnp.sqrt(jnp.float32(state_dim))
    lim2 = 1.0 / jnp.sqrt(jnp.float32(hidden))
    w1 = jax.random.uniform(k1, (hidden, state_dim), jnp.float32, -lim1, lim1)
    b1 = jax.random.uniform(k2, (hidden, 1), jnp.float32, -lim1, lim1)
    w2 = jax.random.uniform(k3, (hidden, 1), jnp.float32, -lim2, lim2)
    b2 = jax.random.uniform(k4, (1,), jnp.float32, -lim2, lim2)
    return w1, b1, w2, b2


if __name__ == "__main__":
    key = jax.random.PRNGKey(0)
    k_x1, k_x2, k_p = jax.random.split(key, 3)

    state_dim = 4                      # CartPole-style critic input
    w1, b1, w2, b2 = init_qnetwork_params(k_p, state_dim)

    # (1) Pallas path: batch above the small-batch threshold, deliberately NOT a
    #     multiple of the tile so the boundary-masking path is exercised too.
    batch_big = 4100
    x_big = jax.random.normal(k_x1, (batch_big, state_dim), jnp.float32)
    out_big = jax.block_until_ready(qnetwork_forward(x_big, w1, b1, w2, b2))
    ref_big = qnetwork_reference(x_big, w1, b1, w2, b2)
    assert out_big.shape == (batch_big, 1)
    assert jnp.allclose(out_big, ref_big, atol=1e-4, rtol=1e-4)

    # (2) Small-batch fallback path (the B=8 actor-critic rollout case).
    batch_small = 8
    x_small = jax.random.normal(k_x2, (batch_small, state_dim), jnp.float32)
    out_small = jax.block_until_ready(qnetwork_forward(x_small, w1, b1, w2, b2))
    ref_small = qnetwork_reference(x_small, w1, b1, w2, b2)
    assert out_small.shape == (batch_small, 1)
    assert jnp.allclose(out_small, ref_small, atol=1e-4, rtol=1e-4)

    print("KERNEL_OK")
</pallas_src>

<mosaic_0001>
module attributes {stable_mosaic.version = 11 : i64} {
  func.func @qnetwork_kernel(%arg0: i32, %arg1: memref<2176x4xf32, #tpu.memory_space<vmem>>, %arg2: memref<20x4xf32, #tpu.memory_space<vmem>>, %arg3: memref<20x1xf32, #tpu.memory_space<vmem>>, %arg4: memref<20x1xf32, #tpu.memory_space<vmem>>, %arg5: memref<1xf32, #tpu.memory_space<smem>>, %arg6: memref<1x2176xf32, #tpu.memory_space<vmem>>) attributes {dimension_semantics = [#tpu.dimension_semantics<parallel>], iteration_bounds = array<i64: 2>, scalar_prefetch = 0 : i64, scratch_operands = 0 : i64, tpu.core_type = #tpu.core_type<tc>, window_params = [{transform_indices = @transform_0, window_bounds = array<i64: 2176, 4>}, {pipeline_mode = #tpu.pipeline_mode<synchronous>, transform_indices = @transform_1, window_bounds = array<i64: 20, 4>}, {pipeline_mode = #tpu.pipeline_mode<synchronous>, transform_indices = @transform_2, window_bounds = array<i64: 20, 1>}, {pipeline_mode = #tpu.pipeline_mode<synchronous>, transform_indices = @transform_3, window_bounds = array<i64: 20, 1>}, {transform_indices = @transform_4, window_bounds = array<i64: 1>}, {transform_indices = @transform_5, window_bounds = array<i64: 1, 2176>}]} {
    %c0 = arith.constant 0 : index
    %c0_0 = arith.constant 0 : index
    %0 = vector.load %arg2[%c0, %c0_0] : memref<20x4xf32, #tpu.memory_space<vmem>>, vector<20x4xf32>
    %c0_1 = arith.constant 0 : index
    %c0_2 = arith.constant 0 : index
    %1 = vector.load %arg1[%c0_1, %c0_2] : memref<2176x4xf32, #tpu.memory_space<vmem>>, vector<2176x4xf32>
    %cst = arith.constant dense<0.000000e+00> : vector<20x2176xf32>
    %2 = tpu.matmul %0, %1, %cst {dimension_numbers = #tpu.dot_dimension_numbers<[1], [1], [0], [0], [0, 0, 1, 0], [], []>} : vector<20x4xf32>, vector<2176x4xf32>, vector<20x2176xf32> -> vector<20x2176xf32>
    %c0_3 = arith.constant 0 : index
    %c0_4 = arith.constant 0 : index
    %3 = vector.load %arg3[%c0_3, %c0_4] : memref<20x1xf32, #tpu.memory_space<vmem>>, vector<20x1xf32>
    %4 = vector.broadcast %3 : vector<20x1xf32> to vector<20x2176xf32>
    %5 = arith.addf %2, %4 : vector<20x2176xf32>
    %cst_5 = arith.constant 0.000000e+00 : f32
    %6 = vector.broadcast %cst_5 : f32 to vector<20x2176xf32>
    %7 = arith.maximumf %5, %6 : vector<20x2176xf32>
    %c0_6 = arith.constant 0 : index
    %c0_7 = arith.constant 0 : index
    %8 = vector.load %arg4[%c0_6, %c0_7] : memref<20x1xf32, #tpu.memory_space<vmem>>, vector<20x1xf32>
    %9 = vector.broadcast %8 : vector<20x1xf32> to vector<20x2176xf32>
    %10 = arith.mulf %7, %9 : vector<20x2176xf32>
    %cst_8 = arith.constant dense<0.000000e+00> : vector<2176xf32>
    %11 = vector.multi_reduction <add>, %10, %cst_8 [0] : vector<20x2176xf32> to vector<2176xf32>
    %12 = vector.shape_cast %11 : vector<2176xf32> to vector<1x2176xf32>
    %c0_9 = arith.constant 0 : index
    %13 = memref.load %arg5[%c0_9] : memref<1xf32, #tpu.memory_space<smem>>
    %14 = vector.broadcast %13 : f32 to vector<1x2176xf32>
    %15 = arith.addf %12, %14 : vector<1x2176xf32>
    %c0_10 = arith.constant 0 : index
    %c0_11 = arith.constant 0 : index
    %16 = vector.load %arg6[%c0_10, %c0_11] : memref<1x2176xf32, #tpu.memory_space<vmem>>, vector<1x2176xf32>
    tpu.vector_store %arg6[%c0_10, %c0_11], %15 {strides = array<i32>} : memref<1x2176xf32, #tpu.memory_space<vmem>>, vector<1x2176xf32>,
    return
  }
  func.func @transform_0(%arg0: i32) -> (i32, i32) {
    %c0_i32 = arith.constant 0 : i32
    %c0_i32_0 = arith.constant 0 : i32
    return %arg0, %c0_i32 : i32, i32
  }
  func.func @transform_1(%arg0: i32) -> (i32, i32) {
    %c0_i32 = arith.constant 0 : i32
    %c0_i32_0 = arith.constant 0 : i32
    %c0_i32_1 = arith.constant 0 : i32
    return %c0_i32, %c0_i32_0 : i32, i32
  }
  func.func @transform_2(%arg0: i32) -> (i32, i32) {
    %c0_i32 = arith.constant 0 : i32
    %c0_i32_0 = arith.constant 0 : i32
    %c0_i32_1 = arith.constant 0 : i32
    return %c0_i32, %c0_i32_0 : i32, i32
  }
  func.func @transform_3(%arg0: i32) -> (i32, i32) {
    %c0_i32 = arith.constant 0 : i32
    %c0_i32_0 = arith.constant 0 : i32
    %c0_i32_1 = arith.constant 0 : i32
    return %c0_i32, %c0_i32_0 : i32, i32
  }
  func.func @transform_4(%arg0: i32) -> i32 {
    %c0_i32 = arith.constant 0 : i32
    %c0_i32_0 = arith.constant 0 : i32
    return %c0_i32 : i32
  }
  func.func @transform_5(%arg0: i32) -> (i32, i32) {
    %c0_i32 = arith.constant 0 : i32
    %c0_i32_0 = arith.constant 0 : i32
    return %c0_i32, %arg0 : i32, i32
  }
}

</mosaic_0001>

<llo_original>
// kernel: qnetwork_forward.1
$region0: #{qnetwork_forward.1}
  #allocation0 [shape = 'u32[]', space=smem, size = 0x4, offset = 0x4, fixed_abs, tag = 'smem constant byte address 0x4 - core index']
  #allocation1 [shape = 'u32[144,128]{1,0:T(1,128)}', space=vmem, size = 0x12000, scoped, tag = 'internal scratch']
  #allocation2 [shape = 'f32[1]{0:T(128)S(6)}', space=smem, size = 0x200, scoped, tag = 'scoped memory for qnetwork_forward.1']
  %s0 = inlined_call_operand.vmem [shape: f32[4100,4], index: 0, kind: input, shape index: {}]
  %s1 = inlined_call_operand.vmem [shape: f32[20,4], index: 1, kind: input, shape index: {}]
  %s2 = inlined_call_operand.vmem [shape: f32[20,1], index: 2, kind: input, shape index: {}]
  %s3 = inlined_call_operand.vmem [shape: f32[20,1], index: 3, kind: input, shape index: {}]
  %s4 = inlined_call_operand.<no memory space> [shape: f32[1], index: 4, kind: input, shape index: {}]
  %s5 = inlined_call_operand.hbm [shape: f32[1,4100], index: 5, kind: output, shape index: {}]
  %s6 = sld [smem:[#allocation0]]
  $region53: #{qnetwork_forward.1} parent=0
    _
  %s8 = ssub.s32 1, %s6
  %s9 = scalar_select 0, %s8, %s6
  %10 = sst [smem:[#allocation2]] %s4
  $region1: #{qnetwork_forward.1} parent=0
    #allocation3 [shape = 'u8[17408]{0}', space=vmem, size = 0x4400, scoped, tag = 'output window, operand 0']
    #allocation4 [shape = 's32[2]{0}', space=sflag, size = 0x8, scoped, tag = 'scoped memory for qnetwork_forward.1']
    %11 = vsyncpa [#allocation4], 0
    %s12 = scalar_lea.sflag [#allocation4], 1
    %13 = vsyncpa %s12, 0
    loop: start=0, step=1, limit=4
    $region2: #{qnetwork_forward.1} parent=1 // loop_pre_header
      _
    $region3: #{qnetwork_forward.1} parent=1 // loop_header
      %s15 = sphi 0, %s19
      %p16 = scmp.ge.s32.totalorder %s15, 4
      %s25 = sphi 0, %s27
      %s28 = sphi 0, %s25
      %s29 = sphi 0, %s28
      %s45 = sphi 0, %s29
      %s49 = sphi 0, %s49
      %s51 = sphi 0, %s49
      %s52 = sphi 0, %s51
      %s66 = sphi 0, %s52
      %s70 = sphi 0, %s70
      %s72 = sphi 0, %s70
      %s73 = sphi 0, %s72
      %s87 = sphi 0, %s73
      %s91 = sphi 0, %s91
      %s93 = sphi 0, %s91
      %s94 = sphi 0, %s93
      %s108 = sphi 0, %s94
      %s112 = sphi 0, %s112
      %s114 = sphi 0, %s112
      %s115 = sphi 0, %s114
      %s129 = sphi 0, %s115
      %s135 = sphi 0, %s137
      %s138 = sphi 0, %s135
      %s139 = sphi 0, %s138
      %s155 = sphi 0, %s139
    $region4: #{qnetwork_forward.1} parent=1 // loop_header_branch
      %18 = sbr.rel (%p16) target = $region8
    $region5: #{qnetwork_forward.1} parent=1 // loop_body
      %s20 = ssub.s32 %s15, 1
      %s21 = ssub.s32 %s15, 2
      %s22 = sadd.s32 %s15, 1
      %s23 = ssub.s32 %s15, %s22
      %p24 = scmp.eq.s32.totalorder %s23, 0
      %s26 = sadd.s32 %s25, 1
      %s27 = scalar_select %p24, %s25, %s26
      %p30 = pneg %p24
      %p31 = scmp.eq.s32.totalorder %s15, 1
      %p32 = por %p30, %p31
      %p33 = scmp.ne.s32.totalorder %s25, %s28
      %p34 = scmp.eq.s32.totalorder %s15, 0
      %p35 = por %p33, %p34
      %p36 = scmp.ne.s32.totalorder %s25, %s28
      %p37 = scmp.eq.s32.totalorder %s20, 1
      %p38 = por %p36, %p37
      %p39 = scmp.ne.s32.totalorder %s28, %s29
      %p40 = scmp.eq.s32.totalorder %s20, 0
      %p41 = por %p39, %p40
      %p42 = scmp.ne.s32.totalorder %s28, %s29
      %p43 = scmp.eq.s32.totalorder %s21, 1
      %p44 = por %p42, %p43
      %p46 = scmp.ne.s32.totalorder %s29, %s45
      %p47 = scmp.eq.s32.totalorder %s21, 0
      %p48 = por %p46, %p47
      %s50 = sadd.s32 %s49, 1
      %p53 = scmp.eq.s32.totalorder %s15, 1
      %p54 = scmp.ne.s32.totalorder %s49, %s51
      %p55 = scmp.eq.s32.totalorder %s15, 0
      %p56 = por %p54, %p55
      %p57 = scmp.ne.s32.totalorder %s49, %s51
      %p58 = scmp.eq.s32.totalorder %s20, 1
      %p59 = por %p57, %p58
      %p60 = scmp.ne.s32.totalorder %s51, %s52
      %p61 = scmp.eq.s32.totalorder %s20, 0
      %p62 = por %p60, %p61
      %p63 = scmp.ne.s32.totalorder %s51, %s52
      %p64 = scmp.eq.s32.totalorder %s21, 1
      %p65 = por %p63, %p64
      %p67 = scmp.ne.s32.totalorder %s52, %s66
      %p68 = scmp.eq.s32.totalorder %s21, 0
      %p69 = por %p67, %p68
      %s71 = sadd.s32 %s70, 1
      %p74 = scmp.eq.s32.totalorder %s15, 1
      %p75 = scmp.ne.s32.totalorder %s70, %s72
      %p76 = scmp.eq.s32.totalorder %s15, 0
      %p77 = por %p75, %p76
      %p78 = scmp.ne.s32.totalorder %s70, %s72
      %p79 = scmp.eq.s32.totalorder %s20, 1
      %p80 = por %p78, %p79
      %p81 = scmp.ne.s32.totalorder %s72, %s73
      %p82 = scmp.eq.s32.totalorder %s20, 0
      %p83 = por %p81, %p82
      %p84 = scmp.ne.s32.totalorder %s72, %s73
      %p85 = scmp.eq.s32.totalorder %s21, 1
      %p86 = por %p84, %p85
      %p88 = scmp.ne.s32.totalorder %s73, %s87
      %p89 = scmp.eq.s32.totalorder %s21, 0
      %p90 = por %p88, %p89
      %s92 = sadd.s32 %s91, 1
      %p95 = scmp.eq.s32.totalorder %s15, 1
      %p96 = scmp.ne.s32.totalorder %s91, %s93
      %p97 = scmp.eq.s32.totalorder %s15, 0
      %p98 = por %p96, %p97
      %p99 = scmp.ne.s32.totalorder %s91, %s93
      %p100 = scmp.eq.s32.totalorder %s20, 1
      %p101 = por %p99, %p100
      %p102 = scmp.ne.s32.totalorder %s93, %s94
      %p103 = scmp.eq.s32.totalorder %s20, 0
      %p104 = por %p102, %p103
      %p105 = scmp.ne.s32.totalorder %s93, %s94
      %p106 = scmp.eq.s32.totalorder %s21, 1
      %p107 = por %p105, %p106
      %p109 = scmp.ne.s32.totalorder %s94, %s108
      %p110 = scmp.eq.s32.totalorder %s21, 0
      %p111 = por %p109, %p110
      %s113 = sadd.s32 %s112, 1
      %p116 = scmp.eq.s32.totalorder %s15, 1
      %p117 = scmp.ne.s32.totalorder %s112, %s114
      %p118 = scmp.eq.s32.totalorder %s15, 0
      %p119 = por %p117, %p118
      %p120 = scmp.ne.s32.totalorder %s112, %s114
      %p121 = scmp.eq.s32.totalorder %s20, 1
      %p122 = por %p120, %p121
      %p123 = scmp.ne.s32.totalorder %s114, %s115
      %p124 = scmp.eq.s32.totalorder %s20, 0
      %p125 = por %p123, %p124
      %p126 = scmp.ne.s32.totalorder %s114, %s115
      %p127 = scmp.eq.s32.totalorder %s21, 1
      %p128 = por %p126, %p127
      %p130 = scmp.ne.s32.totalorder %s115, %s129
      %p131 = scmp.eq.s32.totalorder %s21, 0
      %p132 = por %p130, %p131
      %s133 = ssub.s32 %s15, %s22
      %p134 = scmp.eq.s32.totalorder %s133, 0
      %s136 = sadd.s32 %s135, 1
      %s137 = scalar_select %p134, %s135, %s136
      %p140 = pneg %p134
      %p141 = scmp.eq.s32.totalorder %s15, 1
      %p142 = por %p140, %p141
      %p143 = scmp.ne.s32.totalorder %s135, %s138
      %p144 = scmp.eq.s32.totalorder %s15, 0
      %p145 = por %p143, %p144
      %p146 = scmp.ne.s32.totalorder %s135, %s138
      %p147 = scmp.eq.s32.totalorder %s20, 1
      %p148 = por %p146, %p147
      %p149 = scmp.ne.s32.totalorder %s138, %s139
      %p150 = scmp.eq.s32.totalorder %s20, 0
      %p151 = por %p149, %p150
      %p152 = scmp.ne.s32.totalorder %s138, %s139
      %p153 = scmp.eq.s32.totalorder %s21, 1
      %p154 = por %p152, %p153
      %p156 = scmp.ne.s32.totalorder %s139, %s155
      %p157 = scmp.eq.s32.totalorder %s21, 0
      %p158 = por %p156, %p157
      %p159 = scmp.le.s32.totalorder 1, %s15
      %p160 = scmp.lt.s32.totalorder %s15, 3
      %p161 = pnand %p159, %p160
      %p162 = pneg %p161
      // Predicated region
      $region9: #{qnetwork_forward.1} parent=5 // pred_check
        _
      $region10: #{qnetwork_forward.1} parent=5 // pred_check_branch
        %164 = sbr.rel (%p161) target = $region12
      $region11: #{qnetwork_forward.1} parent=5 // pred_region
        %s165 = ssub.s32 %s15, 1
        // Predicated region
        $region13: #{qnetwork_forward.1} parent=11 // pred_check
          %p166 = pneg %p62
        $region14: #{qnetwork_forward.1} parent=11 // pred_check_branch
          %168 = sbr.rel (%p166) target = $region16
        $region15: #{qnetwork_forward.1} parent=11 // pred_region
          _
        $region16: #{qnetwork_forward.1} parent=11 // pred_fallthru
          _
        // Predicated region
        $region17: #{qnetwork_forward.1} parent=11 // pred_check
          %p169 = pneg %p83
        $region18: #{qnetwork_forward.1} parent=11 // pred_check_branch
          %171 = sbr.rel (%p169) target = $region20
        $region19: #{qnetwork_forward.1} parent=11 // pred_region
          _
        $region20: #{qnetwork_forward.1} parent=11 // pred_fallthru
          _
        // Predicated region
        $region21: #{qnetwork_forward.1} parent=11 // pred_check
          %p172 = pneg %p104
        $region22: #{qnetwork_forward.1} parent=11 // pred_check_branch
          %174 = sbr.rel (%p172) target = $region24
        $region23: #{qnetwork_forward.1} parent=11 // pred_region
          _
        $region24: #{qnetwork_forward.1} parent=11 // pred_fallthru
          _
        // Predicated region
        $region25: #{qnetwork_forward.1} parent=11 // pred_check
          %p175 = pneg %p125
        $region26: #{qnetwork_forward.1} parent=11 // pred_check_branch
          %177 = sbr.rel (%p175) target = $region28
        $region27: #{qnetwork_forward.1} parent=11 // pred_region
          _
        $region28: #{qnetwork_forward.1} parent=11 // pred_fallthru
          _
      $region12: #{qnetwork_forward.1} parent=5 // pred_fallthru
        _
      %p178 = scmp.lt.s32.totalorder %s15, 2
      // Predicated region
      $region29: #{qnetwork_forward.1} parent=5 // pred_check
        %p179 = pneg %p178
      $region30: #{qnetwork_forward.1} parent=5 // pred_check_branch
        %181 = sbr.rel (%p179) target = $region32
      $region31: #{qnetwork_forward.1} parent=5 // pred_region
        // Predicated region
        $region33: #{qnetwork_forward.1} parent=31 // pred_check
          %p182 = pneg %p35
        $region34: #{qnetwork_forward.1} parent=31 // pred_check_branch
          %184 = sbr.rel (%p182) target = $region36
        $region35: #{qnetwork_forward.1} parent=31 // pred_region
          %s185 = smul.u32 272, %s15
          %s186 = ssub.s32 513, %s185
          %p187 = scmp.lt.s32.totalorder %s186, 272
          %s188 = scalar_select %p187, %s186, 272
          %s189 = smul.u32 128, %s188
          %p190 = scmp.lt.s32.totalorder %s185, 512
          %s191 = scalar_select %p190, %s185, 512
          %s192 = smul.addr %s191, 8
          %s193 = scalar_lea.vmem %s0, %s192
          %s194 = smul.u32 272, %s15
          %s195 = ssub.s32 513, %s194
          %p196 = scmp.lt.s32.totalorder %s195, 272
          %s197 = scalar_select %p196, %s195, 272
          %s198 = smul.u32 128, %s197
        $region36: #{qnetwork_forward.1} parent=31 // pred_fallthru
          _
      $region32: #{qnetwork_forward.1} parent=5 // pred_fallthru
        _
      %p199 = scmp.le.s32.totalorder 1, %s15
      %p200 = scmp.lt.s32.totalorder %s15, 3
      %p201 = pnand %p199, %p200
      %p202 = pneg %p201
      // Predicated region
      $region37: #{qnetwork_forward.1} parent=5 // pred_check
        _
      $region38: #{qnetwork_forward.1} parent=5 // pred_check_branch
        %204 = sbr.rel (%p201) target = $region40
      $region39: #{qnetwork_forward.1} parent=5 // pred_region
        %s205 = ssub.s32 %s15, 1
        %s206 = smul.u32 272, %s20
        %s207 = ssub.s32 513, %s206
        %p208 = scmp.lt.s32.totalorder %s207, 272
        %s209 = scalar_select %p208, %s207, 272
        %s210 = smul.u32 128, %s209
        %p211 = scmp.lt.s32.totalorder %s206, 512
        %s212 = scalar_select %p211, %s206, 512
        %s213 = smul.addr %s212, 8
        %s214 = scalar_lea.vmem %s0, %s213
        %p215 = pneg %p41
        %p216 = pneg %p38
        %p217 = pneg %p62
        %p218 = pneg %p59
        %p219 = pneg %p83
        %p220 = pneg %p80
        %p221 = pneg %p104
        %p222 = pneg %p101
        %p223 = pneg %p125
        %p224 = pneg %p122
        %p225 = pneg %p151
        %p226 = pneg %p148
        %s227 = sand.u32 %s138, 1
        %s228 = scalar_lea.sflag [#allocation4], %s227
        %s229 = sand.u32 %s138, 1
        %s230 = smul.addr %s229, 17
        %s231 = scalar_lea.vmem [#allocation3], %s230
        %s232 = smul.u32 272, %s20
        %s233 = ssub.s32 513, %s232
        %p234 = scmp.lt.s32.totalorder %s233, 272
        %s235 = scalar_select %p234, %s233, 272
        %s236 = smul.u32 128, %s235
        %p237 = scmp.lt.s32.totalorder %s232, 512
        %s238 = scalar_select %p237, %s232, 512
        %s239 = smul.addr %s238, 8
        %s240 = scalar_lea.vmem %s0, %s239
        %s241 = smul.u32 272, %s20
        %s242 = ssub.s32 513, %s241
        %p243 = scmp.lt.s32.totalorder %s242, 272
        %s244 = scalar_select %p243, %s242, 272
        %s245 = smul.u32 128, %s244
        %s246 = smul.u32 17, %s20
        %s247 = ssub.s32 33, %s246
        %p248 = scmp.lt.s32.totalorder %s247, 17
        %s249 = scalar_select %p248, %s247, 17
        %s250 = smul.u32 16, %s249
        %v251 = vld [vmem:[%s1] sm:$0xff]
        %v252 = vld [vmem:[%s1 + $0x8] sm:$0xff]
        %v253 = vld [vmem:[%s1 + $0x10] sm:$0xf]
        %v254 = vld [vmem:[%s240] sm:$0xff]
        %v255 = vld [vmem:[%s240 + $0x8] sm:$0xff]
        %v256 = vld [vmem:[%s240 + $0x10] sm:$0xff]
        %v257 = vld [vmem:[%s240 + $0x18] sm:$0xff]
        %v258 = vld [vmem:[%s240 + $0x20] sm:$0xff]
        %v259 = vld [vmem:[%s240 + $0x28] sm:$0xff]
        %v260 = vld [vmem:[%s240 + $0x30] sm:$0xff]
        %v261 = vld [vmem:[%s240 + $0x38] sm:$0xff]
        %v262 = vld [vmem:[%s240 + $0x40] sm:$0xff]
        %v263 = vld [vmem:[%s240 + $0x48] sm:$0xff]
        %v264 = vld [vmem:[%s240 + $0x50] sm:$0xff]
        %v265 = vld [vmem:[%s240 + $0x58] sm:$0xff]
        %v266 = vld [vmem:[%s240 + $0x60] sm:$0xff]
        %v267 = vld [vmem:[%s240 + $0x68] sm:$0xff]
        %v268 = vld [vmem:[%s240 + $0x70] sm:$0xff]
        %v269 = vld [vmem:[%s240 + $0x78] sm:$0xff]
        %v270 = vld [vmem:[%s240 + $0x80] sm:$0xff]
        %v271 = vld [vmem:[%s240 + $0x88] sm:$0xff]
        %v272 = vld [vmem:[%s240 + $0x90] sm:$0xff]
        %v273 = vld [vmem:[%s240 + $0x98] sm:$0xff]
        %v274 = vld [vmem:[%s240 + $0xa0] sm:$0xff]
        %v275 = vld [vmem:[%s240 + $0xa8] sm:$0xff]
        %v276 = vld [vmem:[%s240 + $0xb0] sm:$0xff]
        %v277 = vld [vmem:[%s240 + $0xb8] sm:$0xff]
        %v278 = vld [vmem:[%s240 + $0xc0] sm:$0xff]
        %v279 = vld [vmem:[%s240 + $0xc8] sm:$0xff]
        %v280 = vld [vmem:[%s240 + $0xd0] sm:$0xff]
        %v281 = vld [vmem:[%s240 + $0xd8] sm:$0xff]
        %v282 = vld [vmem:[%s240 + $0xe0] sm:$0xff]
        %v283 = vld [vmem:[%s240 + $0xe8] sm:$0xff]
        %v284 = vld [vmem:[%s240 + $0xf0] sm:$0xff]
        %v285 = vld [vmem:[%s240 + $0xf8] sm:$0xff]
        %v286 = vld [vmem:[%s240 + $0x100] sm:$0xff]
        %v287 = vld [vmem:[%s240 + $0x108] sm:$0xff]
        %v288 = vld [vmem:[%s240 + $0x110] sm:$0xff]
        %v289 = vld [vmem:[%s240 + $0x118] sm:$0xff]
        %v290 = vld [vmem:[%s240 + $0x120] sm:$0xff]
        %v291 = vld [vmem:[%s240 + $0x128] sm:$0xff]
        %v292 = vld [vmem:[%s240 + $0x130] sm:$0xff]
        %v293 = vld [vmem:[%s240 + $0x138] sm:$0xff]
        %v294 = vld [vmem:[%s240 + $0x140] sm:$0xff]
        %v295 = vld [vmem:[%s240 + $0x148] sm:$0xff]
        %v296 = vld [vmem:[%s240 + $0x150] sm:$0xff]
        %v297 = vld [vmem:[%s240 + $0x158] sm:$0xff]
        %v298 = vld [vmem:[%s240 + $0x160] sm:$0xff]
        %v299 = vld [vmem:[%s240 + $0x168] sm:$0xff]
        %v300 = vld [vmem:[%s240 + $0x170] sm:$0xff]
        %v301 = vld [vmem:[%s240 + $0x178] sm:$0xff]
        %v302 = vld [vmem:[%s240 + $0x180] sm:$0xff]
        %v303 = vld [vmem:[%s240 + $0x188] sm:$0xff]
        %v304 = vld [vmem:[%s240 + $0x190] sm:$0xff]
        %v305 = vld [vmem:[%s240 + $0x198] sm:$0xff]
        %v306 = vld [vmem:[%s240 + $0x1a0] sm:$0xff]
        %v307 = vld [vmem:[%s240 + $0x1a8] sm:$0xff]
        %v308 = vld [vmem:[%s240 + $0x1b0] sm:$0xff]
        %v309 = vld [vmem:[%s240 + $0x1b8] sm:$0xff]
        %v310 = vld [vmem:[%s240 + $0x1c0] sm:$0xff]
        %v311 = vld [vmem:[%s240 + $0x1c8] sm:$0xff]
        %v312 = vld [vmem:[%s240 + $0x1d0] sm:$0xff]
        %v313 = vld [vmem:[%s240 + $0x1d8] sm:$0xff]
        %v314 = vld [vmem:[%s240 + $0x1e0] sm:$0xff]
        %v315 = vld [vmem:[%s240 + $0x1e8] sm:$0xff]
        %v316 = vld [vmem:[%s240 + $0x1f0] sm:$0xff]
        %v317 = vld [vmem:[%s240 + $0x1f8] sm:$0xff]
        %v318 = vld [vmem:[%s240 + $0x200] sm:$0xff]
        %v319 = vld [vmem:[%s240 + $0x208] sm:$0xff]
        %v320 = vld [vmem:[%s240 + $0x210] sm:$0xff]
        %v321 = vld [vmem:[%s240 + $0x218] sm:$0xff]
        %v322 = vld [vmem:[%s240 + $0x220] sm:$0xff]
        %v323 = vld [vmem:[%s240 + $0x228] sm:$0xff]
        %v324 = vld [vmem:[%s240 + $0x230] sm:$0xff]
        %v325 = vld [vmem:[%s240 + $0x238] sm:$0xff]
        %v326 = vld [vmem:[%s240 + $0x240] sm:$0xff]
        %v327 = vld [vmem:[%s240 + $0x248] sm:$0xff]
        %v328 = vld [vmem:[%s240 + $0x250] sm:$0xff]
        %v329 = vld [vmem:[%s240 + $0x258] sm:$0xff]
        %v330 = vld [vmem:[%s240 + $0x260] sm:$0xff]
        %v331 = vld [vmem:[%s240 + $0x268] sm:$0xff]
        %v332 = vld [vmem:[%s240 + $0x270] sm:$0xff]
        %v333 = vld [vmem:[%s240 + $0x278] sm:$0xff]
        %v334 = vld [vmem:[%s240 + $0x280] sm:$0xff]
        %v335 = vld [vmem:[%s240 + $0x288] sm:$0xff]
        %v336 = vld [vmem:[%s240 + $0x290] sm:$0xff]
        %v337 = vld [vmem:[%s240 + $0x298] sm:$0xff]
        %v338 = vld [vmem:[%s240 + $0x2a0] sm:$0xff]
        %v339 = vld [vmem:[%s240 + $0x2a8] sm:$0xff]
        %v340 = vld [vmem:[%s240 + $0x2b0] sm:$0xff]
        %v341 = vld [vmem:[%s240 + $0x2b8] sm:$0xff]
        %v342 = vld [vmem:[%s240 + $0x2c0] sm:$0xff]
        %v343 = vld [vmem:[%s240 + $0x2c8] sm:$0xff]
        %v344 = vld [vmem:[%s240 + $0x2d0] sm:$0xff]
        %v345 = vld [vmem:[%s240 + $0x2d8] sm:$0xff]
        %v346 = vld [vmem:[%s240 + $0x2e0] sm:$0xff]
        %v347 = vld [vmem:[%s240 + $0x2e8] sm:$0xff]
        %v348 = vld [vmem:[%s240 + $0x2f0] sm:$0xff]
        %v349 = vld [vmem:[%s240 + $0x2f8] sm:$0xff]
        %v350 = vld [vmem:[%s240 + $0x300] sm:$0xff]
        %v351 = vld [vmem:[%s240 + $0x308] sm:$0xff]
        %v352 = vld [vmem:[%s240 + $0x310] sm:$0xff]
        %v353 = vld [vmem:[%s240 + $0x318] sm:$0xff]
        %v354 = vld [vmem:[%s240 + $0x320] sm:$0xff]
        %v355 = vld [vmem:[%s240 + $0x328] sm:$0xff]
        %v356 = vld [vmem:[%s240 + $0x330] sm:$0xff]
        %v357 = vld [vmem:[%s240 + $0x338] sm:$0xff]
        %v358 = vld [vmem:[%s240 + $0x340] sm:$0xff]
        %v359 = vld [vmem:[%s240 + $0x348] sm:$0xff]
        %v360 = vld [vmem:[%s240 + $0x350] sm:$0xff]
        %v361 = vld [vmem:[%s240 + $0x358] sm:$0xff]
        %v362 = vld [vmem:[%s240 + $0x360] sm:$0xff]
        %v363 = vld [vmem:[%s240 + $0x368] sm:$0xff]
        %v364 = vld [vmem:[%s240 + $0x370] sm:$0xff]
        %v365 = vld [vmem:[%s240 + $0x378] sm:$0xff]
        %v366 = vld [vmem:[%s240 + $0x380] sm:$0xff]
        %v367 = vld [vmem:[%s240 + $0x388] sm:$0xff]
        %v368 = vld [vmem:[%s240 + $0x390] sm:$0xff]
        %v369 = vld [vmem:[%s240 + $0x398] sm:$0xff]
        %v370 = vld [vmem:[%s240 + $0x3a0] sm:$0xff]
        %v371 = vld [vmem:[%s240 + $0x3a8] sm:$0xff]
        %v372 = vld [vmem:[%s240 + $0x3b0] sm:$0xff]
        %v373 = vld [vmem:[%s240 + $0x3b8] sm:$0xff]
        %v374 = vld [vmem:[%s240 + $0x3c0] sm:$0xff]
        %v375 = vld [vmem:[%s240 + $0x3c8] sm:$0xff]
        %v376 = vld [vmem:[%s240 + $0x3d0] sm:$0xff]
        %v377 = vld [vmem:[%s240 + $0x3d8] sm:$0xff]
        %v378 = vld [vmem:[%s240 + $0x3e0] sm:$0xff]
        %v379 = vld [vmem:[%s240 + $0x3e8] sm:$0xff]
        %v380 = vld [vmem:[%s240 + $0x3f0] sm:$0xff]
        %v381 = vld [vmem:[%s240 + $0x3f8] sm:$0xff]
        %v382 = vld [vmem:[%s240 + $0x400] sm:$0xff]
        %v383 = vld [vmem:[%s240 + $0x408] sm:$0xff]
        %v384 = vld [vmem:[%s240 + $0x410] sm:$0xff]
        %v385 = vld [vmem:[%s240 + $0x418] sm:$0xff]
        %v386 = vld [vmem:[%s240 + $0x420] sm:$0xff]
        %v387 = vld [vmem:[%s240 + $0x428] sm:$0xff]
        %v388 = vld [vmem:[%s240 + $0x430] sm:$0xff]
        %v389 = vld [vmem:[%s240 + $0x438] sm:$0xff]
        %v390 = vld [vmem:[%s240 + $0x440] sm:$0xff]
        %v391 = vld [vmem:[%s240 + $0x448] sm:$0xff]
        %v392 = vld [vmem:[%s240 + $0x450] sm:$0xff]
        %v393 = vld [vmem:[%s240 + $0x458] sm:$0xff]
        %v394 = vld [vmem:[%s240 + $0x460] sm:$0xff]
        %v395 = vld [vmem:[%s240 + $0x468] sm:$0xff]
        %v396 = vld [vmem:[%s240 + $0x470] sm:$0xff]
        %v397 = vld [vmem:[%s240 + $0x478] sm:$0xff]
        %v398 = vld [vmem:[%s240 + $0x480] sm:$0xff]
        %v399 = vld [vmem:[%s240 + $0x488] sm:$0xff]
        %v400 = vld [vmem:[%s240 + $0x490] sm:$0xff]
        %v401 = vld [vmem:[%s240 + $0x498] sm:$0xff]
        %v402 = vld [vmem:[%s240 + $0x4a0] sm:$0xff]
        %v403 = vld [vmem:[%s240 + $0x4a8] sm:$0xff]
        %v404 = vld [vmem:[%s240 + $0x4b0] sm:$0xff]
        %v405 = vld [vmem:[%s240 + $0x4b8] sm:$0xff]
        %v406 = vld [vmem:[%s240 + $0x4c0] sm:$0xff]
        %v407 = vld [vmem:[%s240 + $0x4c8] sm:$0xff]
        %v408 = vld [vmem:[%s240 + $0x4d0] sm:$0xff]
        %v409 = vld [vmem:[%s240 + $0x4d8] sm:$0xff]
        %v410 = vld [vmem:[%s240 + $0x4e0] sm:$0xff]
        %v411 = vld [vmem:[%s240 + $0x4e8] sm:$0xff]
        %v412 = vld [vmem:[%s240 + $0x4f0] sm:$0xff]
        %v413 = vld [vmem:[%s240 + $0x4f8] sm:$0xff]
        %v414 = vld [vmem:[%s240 + $0x500] sm:$0xff]
        %v415 = vld [vmem:[%s240 + $0x508] sm:$0xff]
        %v416 = vld [vmem:[%s240 + $0x510] sm:$0xff]
        %v417 = vld [vmem:[%s240 + $0x518] sm:$0xff]
        %v418 = vld [vmem:[%s240 + $0x520] sm:$0xff]
        %v419 = vld [vmem:[%s240 + $0x528] sm:$0xff]
        %v420 = vld [vmem:[%s240 + $0x530] sm:$0xff]
        %v421 = vld [vmem:[%s240 + $0x538] sm:$0xff]
        %v422 = vld [vmem:[%s240 + $0x540] sm:$0xff]
        %v423 = vld [vmem:[%s240 + $0x548] sm:$0xff]
        %v424 = vld [vmem:[%s240 + $0x550] sm:$0xff]
        %v425 = vld [vmem:[%s240 + $0x558] sm:$0xff]
        %v426 = vld [vmem:[%s240 + $0x560] sm:$0xff]
        %v427 = vld [vmem:[%s240 + $0x568] sm:$0xff]
        %v428 = vld [vmem:[%s240 + $0x570] sm:$0xff]
        %v429 = vld [vmem:[%s240 + $0x578] sm:$0xff]
        %v430 = vld [vmem:[%s240 + $0x580] sm:$0xff]
        %v431 = vld [vmem:[%s240 + $0x588] sm:$0xff]
        %v432 = vld [vmem:[%s240 + $0x590] sm:$0xff]
        %v433 = vld [vmem:[%s240 + $0x598] sm:$0xff]
        %v434 = vld [vmem:[%s240 + $0x5a0] sm:$0xff]
        %v435 = vld [vmem:[%s240 + $0x5a8] sm:$0xff]
        %v436 = vld [vmem:[%s240 + $0x5b0] sm:$0xff]
        %v437 = vld [vmem:[%s240 + $0x5b8] sm:$0xff]
        %v438 = vld [vmem:[%s240 + $0x5c0] sm:$0xff]
        %v439 = vld [vmem:[%s240 + $0x5c8] sm:$0xff]
        %v440 = vld [vmem:[%s240 + $0x5d0] sm:$0xff]
        %v441 = vld [vmem:[%s240 + $0x5d8] sm:$0xff]
        %v442 = vld [vmem:[%s240 + $0x5e0] sm:$0xff]
        %v443 = vld [vmem:[%s240 + $0x5e8] sm:$0xff]
        %v444 = vld [vmem:[%s240 + $0x5f0] sm:$0xff]
        %v445 = vld [vmem:[%s240 + $0x5f8] sm:$0xff]
        %v446 = vld [vmem:[%s240 + $0x600] sm:$0xff]
        %v447 = vld [vmem:[%s240 + $0x608] sm:$0xff]
        %v448 = vld [vmem:[%s240 + $0x610] sm:$0xff]
        %v449 = vld [vmem:[%s240 + $0x618] sm:$0xff]
        %v450 = vld [vmem:[%s240 + $0x620] sm:$0xff]
        %v451 = vld [vmem:[%s240 + $0x628] sm:$0xff]
        %v452 = vld [vmem:[%s240 + $0x630] sm:$0xff]
        %v453 = vld [vmem:[%s240 + $0x638] sm:$0xff]
        %v454 = vld [vmem:[%s240 + $0x640] sm:$0xff]
        %v455 = vld [vmem:[%s240 + $0x648] sm:$0xff]
        %v456 = vld [vmem:[%s240 + $0x650] sm:$0xff]
        %v457 = vld [vmem:[%s240 + $0x658] sm:$0xff]
        %v458 = vld [vmem:[%s240 + $0x660] sm:$0xff]
        %v459 = vld [vmem:[%s240 + $0x668] sm:$0xff]
        %v460 = vld [vmem:[%s240 + $0x670] sm:$0xff]
        %v461 = vld [vmem:[%s240 + $0x678] sm:$0xff]
        %v462 = vld [vmem:[%s240 + $0x680] sm:$0xff]
        %v463 = vld [vmem:[%s240 + $0x688] sm:$0xff]
        %v464 = vld [vmem:[%s240 + $0x690] sm:$0xff]
        %v465 = vld [vmem:[%s240 + $0x698] sm:$0xff]
        %v466 = vld [vmem:[%s240 + $0x6a0] sm:$0xff]
        %v467 = vld [vmem:[%s240 + $0x6a8] sm:$0xff]
        %v468 = vld [vmem:[%s240 + $0x6b0] sm:$0xff]
        %v469 = vld [vmem:[%s240 + $0x6b8] sm:$0xff]
        %v470 = vld [vmem:[%s240 + $0x6c0] sm:$0xff]
        %v471 = vld [vmem:[%s240 + $0x6c8] sm:$0xff]
        %v472 = vld [vmem:[%s240 + $0x6d0] sm:$0xff]
        %v473 = vld [vmem:[%s240 + $0x6d8] sm:$0xff]
        %v474 = vld [vmem:[%s240 + $0x6e0] sm:$0xff]
        %v475 = vld [vmem:[%s240 + $0x6e8] sm:$0xff]
        %v476 = vld [vmem:[%s240 + $0x6f0] sm:$0xff]
        %v477 = vld [vmem:[%s240 + $0x6f8] sm:$0xff]
        %v478 = vld [vmem:[%s240 + $0x700] sm:$0xff]
        %v479 = vld [vmem:[%s240 + $0x708] sm:$0xff]
        %v480 = vld [vmem:[%s240 + $0x710] sm:$0xff]
        %v481 = vld [vmem:[%s240 + $0x718] sm:$0xff]
        %v482 = vld [vmem:[%s240 + $0x720] sm:$0xff]
        %v483 = vld [vmem:[%s240 + $0x728] sm:$0xff]
        %v484 = vld [vmem:[%s240 + $0x730] sm:$0xff]
        %v485 = vld [vmem:[%s240 + $0x738] sm:$0xff]
        %v486 = vld [vmem:[%s240 + $0x740] sm:$0xff]
        %v487 = vld [vmem:[%s240 + $0x748] sm:$0xff]
        %v488 = vld [vmem:[%s240 + $0x750] sm:$0xff]
        %v489 = vld [vmem:[%s240 + $0x758] sm:$0xff]
        %v490 = vld [vmem:[%s240 + $0x760] sm:$0xff]
        %v491 = vld [vmem:[%s240 + $0x768] sm:$0xff]
        %v492 = vld [vmem:[%s240 + $0x770] sm:$0xff]
        %v493 = vld [vmem:[%s240 + $0x778] sm:$0xff]
        %v494 = vld [vmem:[%s240 + $0x780] sm:$0xff]
        %v495 = vld [vmem:[%s240 + $0x788] sm:$0xff]
        %v496 = vld [vmem:[%s240 + $0x790] sm:$0xff]
        %v497 = vld [vmem:[%s240 + $0x798] sm:$0xff]
        %v498 = vld [vmem:[%s240 + $0x7a0] sm:$0xff]
        %v499 = vld [vmem:[%s240 + $0x7a8] sm:$0xff]
        %v500 = vld [vmem:[%s240 + $0x7b0] sm:$0xff]
        %v501 = vld [vmem:[%s240 + $0x7b8] sm:$0xff]
        %v502 = vld [vmem:[%s240 + $0x7c0] sm:$0xff]
        %v503 = vld [vmem:[%s240 + $0x7c8] sm:$0xff]
        %v504 = vld [vmem:[%s240 + $0x7d0] sm:$0xff]
        %v505 = vld [vmem:[%s240 + $0x7d8] sm:$0xff]
        %v506 = vld [vmem:[%s240 + $0x7e0] sm:$0xff]
        %v507 = vld [vmem:[%s240 + $0x7e8] sm:$0xff]
        %v508 = vld [vmem:[%s240 + $0x7f0] sm:$0xff]
        %v509 = vld [vmem:[%s240 + $0x7f8] sm:$0xff]
        %v510 = vld [vmem:[%s240 + $0x800] sm:$0xff]
        %v511 = vld [vmem:[%s240 + $0x808] sm:$0xff]
        %v512 = vld [vmem:[%s240 + $0x810] sm:$0xff]
        %v513 = vld [vmem:[%s240 + $0x818] sm:$0xff]
        %v514 = vld [vmem:[%s240 + $0x820] sm:$0xff]
        %v515 = vld [vmem:[%s240 + $0x828] sm:$0xff]
        %v516 = vld [vmem:[%s240 + $0x830] sm:$0xff]
        %v517 = vld [vmem:[%s240 + $0x838] sm:$0xff]
        %v518 = vld [vmem:[%s240 + $0x840] sm:$0xff]
        %v519 = vld [vmem:[%s240 + $0x848] sm:$0xff]
        %v520 = vld [vmem:[%s240 + $0x850] sm:$0xff]
        %v521 = vld [vmem:[%s240 + $0x858] sm:$0xff]
        %v522 = vld [vmem:[%s240 + $0x860] sm:$0xff]
        %v523 = vld [vmem:[%s240 + $0x868] sm:$0xff]
        %v524 = vld [vmem:[%s240 + $0x870] sm:$0xff]
        %v525 = vld [vmem:[%s240 + $0x878] sm:$0xff]
        %v526 = vld [vmem:[%s2] sm:$0xff]
        %v527 = vld [vmem:[%s2 + $0x8] sm:$0xff]
        %v528 = vld [vmem:[%s2 + $0x10] sm:$0xf]
        %530 = vset.pattern.permute.xlu0 0
        %531 = vperm.xlu0 %530, %v526
        %v532 = vpop.permute.xlu0 %531
        %535 = vset.pattern.permute.xlu0 0
        %536 = vperm.xlu0 %535, %v527
        %v537 = vpop.permute.xlu0 %536
        %540 = vset.pattern.permute.xlu0 0
        %541 = vperm.xlu0 %540, %v528
        %v542 = vpop.permute.xlu0 %541
        %vm544 = vcmask 31744
        %v546 = vsel %vm544, %v251, 0
        %v549 = vsel %vm544, %v252, 0
        %v552 = vsel %vm544, %v253, 0
        %v555 = vsel %vm544, %v254, 0
        %v558 = vsel %vm544, %v255, 0
        %v561 = vsel %vm544, %v256, 0
        %v564 = vsel %vm544, %v257, 0
        %v567 = vsel %vm544, %v258, 0
        %v570 = vsel %vm544, %v259, 0
        %v573 = vsel %vm544, %v260, 0
        %v576 = vsel %vm544, %v261, 0
        %v579 = vsel %vm544, %v262, 0
        %v582 = vsel %vm544, %v263, 0
        %v585 = vsel %vm544, %v264, 0
        %v588 = vsel %vm544, %v265, 0
        %v591 = vsel %vm544, %v266, 0
        %v594 = vsel %vm544, %v267, 0
        %v597 = vsel %vm544, %v268, 0
        %v600 = vsel %vm544, %v269, 0
        %v603 = vsel %vm544, %v270, 0
        %v606 = vsel %vm544, %v271, 0
        %v609 = vsel %vm544, %v272, 0
        %v612 = vsel %vm544, %v273, 0
        %v615 = vsel %vm544, %v274, 0
        %v618 = vsel %vm544, %v275, 0
        %v621 = vsel %vm544, %v276, 0
        %v624 = vsel %vm544, %v277, 0
        %v627 = vsel %vm544, %v278, 0
        %v630 = vsel %vm544, %v279, 0
        %v633 = vsel %vm544, %v280, 0
        %v636 = vsel %vm544, %v281, 0
        %v639 = vsel %vm544, %v282, 0
        %v642 = vsel %vm544, %v283, 0
        %v645 = vsel %vm544, %v284, 0
        %v648 = vsel %vm544, %v285, 0
        %v651 = vsel %vm544, %v286, 0
        %v654 = vsel %vm544, %v287, 0
        %v657 = vsel %vm544, %v288, 0
        %v660 = vsel %vm544, %v289, 0
        %v663 = vsel %vm544, %v290, 0
        %v666 = vsel %vm544, %v291, 0
        %v669 = vsel %vm544, %v292, 0
        %v672 = vsel %vm544, %v293, 0
        %v675 = vsel %vm544, %v294, 0
        %v678 = vsel %vm544, %v295, 0
        %v681 = vsel %vm544, %v296, 0
        %v684 = vsel %vm544, %v297, 0
        %v687 = vsel %vm544, %v298, 0
        %v690 = vsel %vm544, %v299, 0
        %v693 = vsel %vm544, %v300, 0
        %v696 = vsel %vm544, %v301, 0
        %v699 = vsel %vm544, %v302, 0
        %v702 = vsel %vm544, %v303, 0
        %v705 = vsel %vm544, %v304, 0
        %v708 = vsel %vm544, %v305, 0
        %v711 = vsel %vm544, %v306, 0
        %v714 = vsel %vm544, %v307, 0
        %v717 = vsel %vm544, %v308, 0
        %v720 = vsel %vm544, %v309, 0
        %v723 = vsel %vm544, %v310, 0
        %v726 = vsel %vm544, %v311, 0
        %v729 = vsel %vm544, %v312, 0
        %v732 = vsel %vm544, %v313, 0
        %v735 = vsel %vm544, %v314, 0
        %v738 = vsel %vm544, %v315, 0
        %v741 = vsel %vm544, %v316, 0
        %v744 = vsel %vm544, %v317, 0
        %v747 = vsel %vm544, %v318, 0
        %v750 = vsel %vm544, %v319, 0
        %v753 = vsel %vm544, %v320, 0
        %v756 = vsel %vm544, %v321, 0
        %v759 = vsel %vm544, %v322, 0
        %v762 = vsel %vm544, %v323, 0
        %v765 = vsel %vm544, %v324, 0
        %v768 = vsel %vm544, %v325, 0
        %v771 = vsel %vm544, %v326, 0
        %v774 = vsel %vm544, %v327, 0
        %v777 = vsel %vm544, %v328, 0
        %v780 = vsel %vm544, %v329, 0
        %v783 = vsel %vm544, %v330, 0
        %v786 = vsel %vm544, %v331, 0
        %v789 = vsel %vm544, %v332, 0
        %v792 = vsel %vm544, %v333, 0
        %v795 = vsel %vm544, %v334, 0
        %v798 = vsel %vm544, %v335, 0
        %v801 = vsel %vm544, %v336, 0
        %v804 = vsel %vm544, %v337, 0
        %v807 = vsel %vm544, %v338, 0
        %v810 = vsel %vm544, %v339, 0
        %v813 = vsel %vm544, %v340, 0
        %v816 = vsel %vm544, %v341, 0
        %v819 = vsel %vm544, %v342, 0
        %v822 = vsel %vm544, %v343, 0
        %v825 = vsel %vm544, %v344, 0
        %v828 = vsel %vm544, %v345, 0
        %v831 = vsel %vm544, %v346, 0
        %v834 = vsel %vm544, %v347, 0
        %v837 = vsel %vm544, %v348, 0
        %v840 = vsel %vm544, %v349, 0
        %v843 = vsel %vm544, %v350, 0
        %v846 = vsel %vm544, %v351, 0
        %v849 = vsel %vm544, %v352, 0
        %v852 = vsel %vm544, %v353, 0
        %v855 = vsel %vm544, %v354, 0
        %v858 = vsel %vm544, %v355, 0
        %v861 = vsel %vm544, %v356, 0
        %v864 = vsel %vm544, %v357, 0
        %v867 = vsel %vm544, %v358, 0
        %v870 = vsel %vm544, %v359, 0
        %v873 = vsel %vm544, %v360, 0
        %v876 = vsel %vm544, %v361, 0
        %v879 = vsel %vm544, %v362, 0
        %v882 = vsel %vm544, %v363, 0
        %v885 = vsel %vm544, %v364, 0
        %v888 = vsel %vm544, %v365, 0
        %v891 = vsel %vm544, %v366, 0
        %v894 = vsel %vm544, %v367, 0
        %v897 = vsel %vm544, %v368, 0
        %v900 = vsel %vm544, %v369, 0
        %v903 = vsel %vm544, %v370, 0
        %v906 = vsel %vm544, %v371, 0
        %v909 = vsel %vm544, %v372, 0
        %v912 = vsel %vm544, %v373, 0
        %v915 = vsel %vm544, %v374, 0
        %v918 = vsel %vm544, %v375, 0
        %v921 = vsel %vm544, %v376, 0
        %v924 = vsel %vm544, %v377, 0
        %v927 = vsel %vm544, %v378, 0
        %v930 = vsel %vm544, %v379, 0
        %v933 = vsel %vm544, %v380, 0
        %v936 = vsel %vm544, %v381, 0
        %v939 = vsel %vm544, %v382, 0
        %v942 = vsel %vm544, %v383, 0
        %v945 = vsel %vm544, %v384, 0
        %v948 = vsel %vm544, %v385, 0
        %v951 = vsel %vm544, %v386, 0
        %v954 = vsel %vm544, %v387, 0
        %v957 = vsel %vm544, %v388, 0
        %v960 = vsel %vm544, %v389, 0
        %v963 = vsel %vm544, %v390, 0
        %v966 = vsel %vm544, %v391, 0
        %v969 = vsel %vm544, %v392, 0
        %v972 = vsel %vm544, %v393, 0
        %v975 = vsel %vm544, %v394, 0
        %v978 = vsel %vm544, %v395, 0
        %v981 = vsel %vm544, %v396, 0
        %v984 = vsel %vm544, %v397, 0
        %v987 = vsel %vm544, %v398, 0
        %v990 = vsel %vm544, %v399, 0
        %v993 = vsel %vm544, %v400, 0
        %v996 = vsel %vm544, %v401, 0
        %v999 = vsel %vm544, %v402, 0
        %v1002 = vsel %vm544, %v403, 0
        %v1005 = vsel %vm544, %v404, 0
        %v1008 = vsel %vm544, %v405, 0
        %v1011 = vsel %vm544, %v406, 0
        %v1014 = vsel %vm544, %v407, 0
        %v1017 = vsel %vm544, %v408, 0
        %v1020 = vsel %vm544, %v409, 0
        %v1023 = vsel %vm544, %v410, 0
        %v1026 = vsel %vm544, %v411, 0
        %v1029 = vsel %vm544, %v412, 0
        %v1032 = vsel %vm544, %v413, 0
        %v1035 = vsel %vm544, %v414, 0
        %v1038 = vsel %vm544, %v415, 0
        %v1041 = vsel %vm544, %v416, 0
        %v1044 = vsel %vm544, %v417, 0
        %v1047 = vsel %vm544, %v418, 0
        %v1050 = vsel %vm544, %v419, 0
        %v1053 = vsel %vm544, %v420, 0
        %v1056 = vsel %vm544, %v421, 0
        %v1059 = vsel %vm544, %v422, 0
        %v1062 = vsel %vm544, %v423, 0
        %v1065 = vsel %vm544, %v424, 0
        %v1068 = vsel %vm544, %v425, 0
        %v1071 = vsel %vm544, %v426, 0
        %v1074 = vsel %vm544, %v427, 0
        %v1077 = vsel %vm544, %v428, 0
        %v1080 = vsel %vm544, %v429, 0
        %v1083 = vsel %vm544, %v430, 0
        %v1086 = vsel %vm544, %v431, 0
        %v1089 = vsel %vm544, %v432, 0
        %v1092 = vsel %vm544, %v433, 0
        %v1095 = vsel %vm544, %v434, 0
        %v1098 = vsel %vm544, %v435, 0
        %v1101 = vsel %vm544, %v436, 0
        %v1104 = vsel %vm544, %v437, 0
        %v1107 = vsel %vm544, %v438, 0
        %v1110 = vsel %vm544, %v439, 0
        %v1113 = vsel %vm544, %v440, 0
        %v1116 = vsel %vm544, %v441, 0
        %v1119 = vsel %vm544, %v442, 0
        %v1122 = vsel %vm544, %v443, 0
        %v1125 = vsel %vm544, %v444, 0
        %v1128 = vsel %vm544, %v445, 0
        %v1131 = vsel %vm544, %v446, 0
        %v1134 = vsel %vm544, %v447, 0
        %v1137 = vsel %vm544, %v448, 0
        %v1140 = vsel %vm544, %v449, 0
        %v1143 = vsel %vm544, %v450, 0
        %v1146 = vsel %vm544, %v451, 0
        %v1149 = vsel %vm544, %v452, 0
        %v1152 = vsel %vm544, %v453, 0
        %v1155 = vsel %vm544, %v454, 0
        %v1158 = vsel %vm544, %v455, 0
        %v1161 = vsel %vm544, %v456, 0
        %v1164 = vsel %vm544, %v457, 0
        %v1167 = vsel %vm544, %v458, 0
        %v1170 = vsel %vm544, %v459, 0
        %v1173 = vsel %vm544, %v460, 0
        %v1176 = vsel %vm544, %v461, 0
        %v1179 = vsel %vm544, %v462, 0
        %v1182 = vsel %vm544, %v463, 0
        %v1185 = vsel %vm544, %v464, 0
        %v1188 = vsel %vm544, %v465, 0
        %v1191 = vsel %vm544, %v466, 0
        %v1194 = vsel %vm544, %v467, 0
        %v1197 = vsel %vm544, %v468, 0
        %v1200 = vsel %vm544, %v469, 0
        %v1203 = vsel %vm544, %v470, 0
        %v1206 = vsel %vm544, %v471, 0
        %v1209 = vsel %vm544, %v472, 0
        %v1212 = vsel %vm544, %v473, 0
        %v1215 = vsel %vm544, %v474, 0
        %v1218 = vsel %vm544, %v475, 0
        %v1221 = vsel %vm544, %v476, 0
        %v1224 = vsel %vm544, %v477, 0
        %v1227 = vsel %vm544, %v478, 0
        %v1230 = vsel %vm544, %v479, 0
        %v1233 = vsel %vm544, %v480, 0
        %v1236 = vsel %vm544, %v481, 0
        %v1239 = vsel %vm544, %v482, 0
        %v1242 = vsel %vm544, %v483, 0
        %v1245 = vsel %vm544, %v484, 0
        %v1248 = vsel %vm544, %v485, 0
        %v1251 = vsel %vm544, %v486, 0
        %v1254 = vsel %vm544, %v487, 0
        %v1257 = vsel %vm544, %v488, 0
        %v1260 = vsel %vm544, %v489, 0
        %v1263 = vsel %vm544, %v490, 0
        %v1266 = vsel %vm544, %v491, 0
        %v1269 = vsel %vm544, %v492, 0
        %v1272 = vsel %vm544, %v493, 0
        %v1275 = vsel %vm544, %v494, 0
        %v1278 = vsel %vm544, %v495, 0
        %v1281 = vsel %vm544, %v496, 0
        %v1284 = vsel %vm544, %v497, 0
        %v1287 = vsel %vm544, %v498, 0
        %v1290 = vsel %vm544, %v499, 0
        %v1293 = vsel %vm544, %v500, 0
        %v1296 = vsel %vm544, %v501, 0
        %v1299 = vsel %vm544, %v502, 0
        %v1302 = vsel %vm544, %v503, 0
        %v1305 = vsel %vm544, %v504, 0
        %v1308 = vsel %vm544, %v505, 0
        %v1311 = vsel %vm544, %v506, 0
        %v1314 = vsel %vm544, %v507, 0
        %v1317 = vsel %vm544, %v508, 0
        %v1320 = vsel %vm544, %v509, 0
        %v1323 = vsel %vm544, %v510, 0
        %v1326 = vsel %vm544, %v511, 0
        %v1329 = vsel %vm544, %v512, 0
        %v1332 = vsel %vm544, %v513, 0
        %v1335 = vsel %vm544, %v514, 0
        %v1338 = vsel %vm544, %v515, 0
        %v1341 = vsel %vm544, %v516, 0
        %v1344 = vsel %vm544, %v517, 0
        %v1347 = vsel %vm544, %v518, 0
        %v1350 = vsel %vm544, %v519, 0
        %v1353 = vsel %vm544, %v520, 0
        %v1356 = vsel %vm544, %v521, 0
        %v1359 = vsel %vm544, %v522, 0
        %v1362 = vsel %vm544, %v523, 0
        %v1365 = vsel %vm544, %v524, 0
        %v1368 = vsel %vm544, %v525, 0
        %1370 = vmatprep.subr.mxu0 0.0
        %1371 = vmatpush1.xpose.msra.mxu0 %v555
        %1372 = vmatprep.subr.mxu0 0.0
        %1373 = vmatpush1.xpose.msra.mxu0 %v558
        %1374 = vmatprep.subr.mxu0 0.0
        %1375 = vmatpush1.xpose.msra.mxu0 %v561
        %1376 = vmatprep.subr.mxu0 0.0
        %1377 = vmatpush1.xpose.msra.mxu0 %v564
        %1378 = vmatprep.subr.mxu0 0.0
        %1379 = vmatpush1.xpose.msra.mxu0 %v567
        %1380 = vmatprep.subr.mxu0 0.0
        %1381 = vmatpush1.xpose.msra.mxu0 %v570
        %1382 = vmatprep.subr.mxu0 0.0
        %1383 = vmatpush1.xpose.msra.mxu0 %v573
        %1384 = vmatprep.subr.mxu0 0.0
        %1385 = vmatpush1.xpose.msra.mxu0 %v576
        %1386 = vmatprep.subr.mxu0 0.0
        %1387 = vmatpush1.xpose.msra.mxu0 %v579
        %1388 = vmatprep.subr.mxu0 0.0
        %1389 = vmatpush1.xpose.msra.mxu0 %v582
        %1390 = vmatprep.subr.mxu0 0.0
        %1391 = vmatpush1.xpose.msra.mxu0 %v585
        %1392 = vmatprep.subr.mxu0 0.0
        %1393 = vmatpush1.xpose.msra.mxu0 %v588
        %1394 = vmatprep.subr.mxu0 0.0
        %1395 = vmatpush1.xpose.msra.mxu0 %v591
        %1396 = vmatprep.subr.mxu0 0.0
        %1397 = vmatpush1.xpose.msra.mxu0 %v594
        %1398 = vmatprep.subr.mxu0 0.0
        %1399 = vmatpush1.xpose.msra.mxu0 %v597
        %1400 = vmatprep.subr.mxu0 0.0
        %1401 = vmatpush1.xpose.msra.mxu0 %v600
        %1402 = vmatprep.subr.mxu0 0.0
        %1403 = vmatpush1.xpose.msra.mxu0 %v603
        %1404 = vmatprep.subr.mxu0 0.0
        %1405 = vmatpush1.xpose.msra.mxu0 %v606
        %1406 = vmatprep.subr.mxu0 0.0
        %1407 = vmatpush1.xpose.msra.mxu0 %v609
        %1408 = vmatprep.subr.mxu0 0.0
        %1409 = vmatpush1.xpose.msra.mxu0 %v612
        %1410 = vmatprep.subr.mxu0 0.0
        %1411 = vmatpush1.xpose.msra.mxu0 %v615
        %1412 = vmatprep.subr.mxu0 0.0
        %1413 = vmatpush1.xpose.msra.mxu0 %v618
        %1414 = vmatprep.subr.mxu0 0.0
        %1415 = vmatpush1.xpose.msra.mxu0 %v621
        %1416 = vmatprep.subr.mxu0 0.0
        %1417 = vmatpush1.xpose.msra.mxu0 %v624
        %1418 = vmatprep.subr.mxu0 0.0
        %1419 = vmatpush1.xpose.msra.mxu0 %v627
        %1420 = vmatprep.subr.mxu0 0.0
        %1421 = vmatpush1.xpose.msra.mxu0 %v630
        %1422 = vmatprep.subr.mxu0 0.0
        %1423 = vmatpush1.xpose.msra.mxu0 %v633
        %1424 = vmatprep.subr.mxu0 0.0
        %1425 = vmatpush1.xpose.msra.mxu0 %v636
        %1426 = vmatprep.subr.mxu0 0.0
        %1427 = vmatpush1.xpose.msra.mxu0 %v639
        %1428 = vmatprep.subr.mxu0 0.0
        %1429 = vmatpush1.xpose.msra.mxu0 %v642
        %1430 = vmatprep.subr.mxu0 0.0
        %1431 = vmatpush1.xpose.msra.mxu0 %v645
        %1432 = vmatprep.subr.mxu0 0.0
        %1433 = vmatpush1.xpose.msra.mxu0 %v648
        %1434 = vmatprep.mubr.f32.mxu0 0.0
        %1435 = vmatmul.mubr.f32.gmra.mrb[0].mxu0 %v546
        %v1436 = vpop.f32.mrb[0].mxu0
        %v1437 = vadd.f32 %v532, %v1436
        %v1438 = vpop.f32.mrb[0].mxu0
        %v1439 = vadd.f32 %v532, %v1438
        %1440 = vmatprep.mubr.f32.mxu0 0.0
        %1441 = vmatmul.mubr.f32.gmra.mrb[0].mxu0 %v549
        %v1442 = vpop.f32.mrb[0].mxu0
        %v1443 = vadd.f32 %v537, %v1442
        %v1444 = vpop.f32.mrb[0].mxu0
        %v1445 = vadd.f32 %v537, %v1444
        %1446 = vmatprep.mubr.f32.mxu0 0.0
        %1447 = vmatmul.mubr.f32.gmra.mrb[0].mxu0 %v552
        %v1448 = vpop.f32.mrb[0].mxu0
        %v1449 = vadd.f32 %v542, %v1448
        %v1450 = vpop.f32.mrb[0].mxu0
        %v1451 = vadd.f32 %v542, %v1450
        %1452 = vdwg.mxu0
        %1453 = vmatprep.subr.mxu0 0.0
        %1454 = vmatpush1.xpose.msra.mxu0 %v651
        %1455 = vmatprep.subr.mxu0 0.0
        %1456 = vmatpush1.xpose.msra.mxu0 %v654
        %1457 = vmatprep.subr.mxu0 0.0
        %1458 = vmatpush1.xpose.msra.mxu0 %v657
        %1459 = vmatprep.subr.mxu0 0.0
        %1460 = vmatpush1.xpose.msra.mxu0 %v660
        %1461 = vmatprep.subr.mxu0 0.0
        %1462 = vmatpush1.xpose.msra.mxu0 %v663
        %1463 = vmatprep.subr.mxu0 0.0
        %1464 = vmatpush1.xpose.msra.mxu0 %v666
        %1465 = vmatprep.subr.mxu0 0.0
        %1466 = vmatpush1.xpose.msra.mxu0 %v669
        %1467 = vmatprep.subr.mxu0 0.0
        %1468 = vmatpush1.xpose.msra.mxu0 %v672
        %1469 = vmatprep.subr.mxu0 0.0
        %1470 = vmatpush1.xpose.msra.mxu0 %v675
        %1471 = vmatprep.subr.mxu0 0.0
        %1472 = vmatpush1.xpose.msra.mxu0 %v678
        %1473 = vmatprep.subr.mxu0 0.0
        %1474 = vmatpush1.xpose.msra.mxu0 %v681
        %1475 = vmatprep.subr.mxu0 0.0
        %1476 = vmatpush1.xpose.msra.mxu0 %v684
        %1477 = vmatprep.subr.mxu0 0.0
        %1478 = vmatpush1.xpose.msra.mxu0 %v687
        %1479 = vmatprep.subr.mxu0 0.0
        %1480 = vmatpush1.xpose.msra.mxu0 %v690
        %1481 = vmatprep.subr.mxu0 0.0
        %1482 = vmatpush1.xpose.msra.mxu0 %v693
        %1483 = vmatprep.subr.mxu0 0.0
        %1484 = vmatpush1.xpose.msra.mxu0 %v696
        %1485 = vmatprep.subr.mxu0 0.0
        %1486 = vmatpush1.xpose.msra.mxu0 %v699
        %1487 = vmatprep.subr.mxu0 0.0
        %1488 = vmatpush1.xpose.msra.mxu0 %v702
        %1489 = vmatprep.subr.mxu0 0.0
        %1490 = vmatpush1.xpose.msra.mxu0 %v705
        %1491 = vmatprep.subr.mxu0 0.0
        %1492 = vmatpush1.xpose.msra.mxu0 %v708
        %1493 = vmatprep.subr.mxu0 0.0
        %1494 = vmatpush1.xpose.msra.mxu0 %v711
        %1495 = vmatprep.subr.mxu0 0.0
        %1496 = vmatpush1.xpose.msra.mxu0 %v714
        %1497 = vmatprep.subr.mxu0 0.0
        %1498 = vmatpush1.xpose.msra.mxu0 %v717
        %1499 = vmatprep.subr.mxu0 0.0
        %1500 = vmatpush1.xpose.msra.mxu0 %v720
        %1501 = vmatprep.subr.mxu0 0.0
        %1502 = vmatpush1.xpose.msra.mxu0 %v723
        %1503 = vmatprep.subr.mxu0 0.0
        %1504 = vmatpush1.xpose.msra.mxu0 %v726
        %1505 = vmatprep.subr.mxu0 0.0
        %1506 = vmatpush1.xpose.msra.mxu0 %v729
        %1507 = vmatprep.subr.mxu0 0.0
        %1508 = vmatpush1.xpose.msra.mxu0 %v732
        %1509 = vmatprep.subr.mxu0 0.0
        %1510 = vmatpush1.xpose.msra.mxu0 %v735
        %1511 = vmatprep.subr.mxu0 0.0
        %1512 = vmatpush1.xpose.msra.mxu0 %v738
        %1513 = vmatprep.subr.mxu0 0.0
        %1514 = vmatpush1.xpose.msra.mxu0 %v741
        %1515 = vmatprep.subr.mxu0 0.0
        %1516 = vmatpush1.xpose.msra.mxu0 %v744
        %1517 = vmatprep.mubr.f32.mxu0 0.0
        %1518 = vmatmul.mubr.f32.gmra.mrb[0].mxu0 %v546
        %v1519 = vpop.f32.mrb[0].mxu0
        %v1520 = vadd.f32 %v532, %v1519
        %v1521 = vpop.f32.mrb[0].mxu0
        %v1522 = vadd.f32 %v532, %v1521
        %1523 = vmatprep.mubr.f32.mxu0 0.0
        %1524 = vmatmul.mubr.f32.gmra.mrb[0].mxu0 %v549
        %v1525 = vpop.f32.mrb[0].mxu0
        %v1526 = vadd.f32 %v537, %v1525
        %v1527 = vpop.f32.mrb[0].mxu0
        %v1528 = vadd.f32 %v537, %v1527
        %1529 = vmatprep.mubr.f32.mxu0 0.0
        %1530 = vmatmul.mubr.f32.gmra.mrb[0].mxu0 %v552
        %v1531 = vpop.f32.mrb[0].mxu0
        %v1532 = vadd.f32 %v542, %v1531
        %v1533 = vpop.f32.mrb[0].mxu0
        %v1534 = vadd.f32 %v542, %v1533
        %1535 = vdwg.mxu0
        %1536 = vmatprep.subr.mxu0 0.0
        %1537 = vmatpush1.xpose.msra.mxu0 %v747
        %1538 = vmatprep.subr.mxu0 0.0
        %1539 = vmatpush1.xpose.msra.mxu0 %v750
        %1540 = vmatprep.subr.mxu0 0.0
        %1541 = vmatpush1.xpose.msra.mxu0 %v753
        %1542 = vmatprep.subr.mxu0 0.0
        %1543 = vmatpush1.xpose.msra.mxu0 %v756
        %1544 = vmatprep.subr.mxu0 0.0
        %1545 = vmatpush1.xpose.msra.mxu0 %v759
        %1546 = vmatprep.subr.mxu0 0.0
        %1547 = vmatpush1.xpose.msra.mxu0 %v762
        %1548 = vmatprep.subr.mxu0 0.0
        %1549 = vmatpush1.xpose.msra.mxu0 %v765
        %1550 = vmatprep.subr.mxu0 0.0
        %1551 = vmatpush1.xpose.msra.mxu0 %v768
        %1552 = vmatprep.subr.mxu0 0.0
        %1553 = vmatpush1.xpose.msra.mxu0 %v771
        %1554 = vmatprep.subr.mxu0 0.0
        %1555 = vmatpush1.xpose.msra.mxu0 %v774
        %1556 = vmatprep.subr.mxu0 0.0
        %1557 = vmatpush1.xpose.msra.mxu0 %v777
        %1558 = vmatprep.subr.mxu0 0.0
        %1559 = vmatpush1.xpose.msra.mxu0 %v780
        %1560 = vmatprep.subr.mxu0 0.0
        %1561 = vmatpush1.xpose.msra.mxu0 %v783
        %1562 = vmatprep.subr.mxu0 0.0
        %1563 = vmatpush1.xpose.msra.mxu0 %v786
        %1564 = vmatprep.subr.mxu0 0.0
        %1565 = vmatpush1.xpose.msra.mxu0 %v789
        %1566 = vmatprep.subr.mxu0 0.0
        %1567 = vmatpush1.xpose.msra.mxu0 %v792
        %1568 = vmatprep.subr.mxu0 0.0
        %1569 = vmatpush1.xpose.msra.mxu0 %v795
        %1570 = vmatprep.subr.mxu0 0.0
        %1571 = vmatpush1.xpose.msra.mxu0 %v798
        %1572 = vmatprep.subr.mxu0 0.0
        %1573 = vmatpush1.xpose.msra.mxu0 %v801
        %1574 = vmatprep.subr.mxu0 0.0
        %1575 = vmatpush1.xpose.msra.mxu0 %v804
        %1576 = vmatprep.subr.mxu0 0.0
        %1577 = vmatpush1.xpose.msra.mxu0 %v807
        %1578 = vmatprep.subr.mxu0 0.0
        %1579 = vmatpush1.xpose.msra.mxu0 %v810
        %1580 = vmatprep.subr.mxu0 0.0
        %1581 = vmatpush1.xpose.msra.mxu0 %v813
        %1582 = vmatprep.subr.mxu0 0.0
        %1583 = vmatpush1.xpose.msra.mxu0 %v816
        %1584 = vmatprep.subr.mxu0 0.0
        %1585 = vmatpush1.xpose.msra.mxu0 %v819
        %1586 = vmatprep.subr.mxu0 0.0
        %1587 = vmatpush1.xpose.msra.mxu0 %v822
        %1588 = vmatprep.subr.mxu0 0.0
        %1589 = vmatpush1.xpose.msra.mxu0 %v825
        %1590 = vmatprep.subr.mxu0 0.0
        %1591 = vmatpush1.xpose.msra.mxu0 %v828
        %1592 = vmatprep.subr.mxu0 0.0
        %1593 = vmatpush1.xpose.msra.mxu0 %v831
        %1594 = vmatprep.subr.mxu0 0.0
        %1595 = vmatpush1.xpose.msra.mxu0 %v834
        %1596 = vmatprep.subr.mxu0 0.0
        %1597 = vmatpush1.xpose.msra.mxu0 %v837
        %1598 = vmatprep.subr.mxu0 0.0
        %1599 = vmatpush1.xpose.msra.mxu0 %v840
        %1600 = vmatprep.mubr.f32.mxu0 0.0
        %1601 = vmatmul.mubr.f32.gmra.mrb[0].mxu0 %v546
        %v1602 = vpop.f32.mrb[0].mxu0
        %v1603 = vadd.f32 %v532, %v1602
        %v1604 = vpop.f32.mrb[0].mxu0
        %v1605 = vadd.f32 %v532, %v1604
        %1606 = vmatprep.mubr.f32.mxu0 0.0
        %1607 = vmatmul.mubr.f32.gmra.mrb[0].mxu0 %v549
        %v1608 = vpop.f32.mrb[0].mxu0
        %v1609 = vadd.f32 %v537, %v1608
        %v1610 = vpop.f32.mrb[0].mxu0
        %v1611 = vadd.f32 %v537, %v1610
        %1612 = vmatprep.mubr.f32.mxu0 0.0
        %1613 = vmatmul.mubr.f32.gmra.mrb[0].mxu0 %v552
        %v1614 = vpop.f32.mrb[0].mxu0
        %v1615 = vadd.f32 %v542, %v1614
        %v1616 = vpop.f32.mrb[0].mxu0
        %v1617 = vadd.f32 %v542, %v1616
        %1618 = vdwg.mxu0
        %1619 = vmatprep.subr.mxu0 0.0
        %1620 = vmatpush1.xpose.msra.mxu0 %v843
        %1621 = vmatprep.subr.mxu0 0.0
        %1622 = vmatpush1.xpose.msra.mxu0 %v846
        %1623 = vmatprep.subr.mxu0 0.0
        %1624 = vmatpush1.xpose.msra.mxu0 %v849
        %1625 = vmatprep.subr.mxu0 0.0
        %1626 = vmatpush1.xpose.msra.mxu0 %v852
        %1627 = vmatprep.subr.mxu0 0.0
        %1628 = vmatpush1.xpose.msra.mxu0 %v855
        %1629 = vmatprep.subr.mxu0 0.0
        %1630 = vmatpush1.xpose.msra.mxu0 %v858
        %1631 = vmatprep.subr.mxu0 0.0
        %1632 = vmatpush1.xpose.msra.mxu0 %v861
        %1633 = vmatprep.subr.mxu0 0.0
        %1634 = vmatpush1.xpose.msra.mxu0 %v864
        %1635 = vmatprep.subr.mxu0 0.0
        %1636 = vmatpush1.xpose.msra.mxu0 %v867
        %1637 = vmatprep.subr.mxu0 0.0
        %1638 = vmatpush1.xpose.msra.mxu0 %v870
        %1639 = vmatprep.subr.mxu0 0.0
        %1640 = vmatpush1.xpose.msra.mxu0 %v873
        %1641 = vmatprep.subr.mxu0 0.0
        %1642 = vmatpush1.xpose.msra.mxu0 %v876
        %1643 = vmatprep.subr.mxu0 0.0
        %1644 = vmatpush1.xpose.msra.mxu0 %v879
        %1645 = vmatprep.subr.mxu0 0.0
        %1646 = vmatpush1.xpose.msra.mxu0 %v882
        %1647 = vmatprep.subr.mxu0 0.0
        %1648 = vmatpush1.xpose.msra.mxu0 %v885
        %1649 = vmatprep.subr.mxu0 0.0
        %1650 = vmatpush1.xpose.msra.mxu0 %v888
        %1651 = vmatprep.subr.mxu0 0.0
        %1652 = vmatpush1.xpose.msra.mxu0 %v891
        %1653 = vmatprep.subr.mxu0 0.0
        %1654 = vmatpush1.xpose.msra.mxu0 %v894
        %1655 = vmatprep.subr.mxu0 0.0
        %1656 = vmatpush1.xpose.msra.mxu0 %v897
        %1657 = vmatprep.subr.mxu0 0.0
        %1658 = vmatpush1.xpose.msra.mxu0 %v900
        %1659 = vmatprep.subr.mxu0 0.0
        %1660 = vmatpush1.xpose.msra.mxu0 %v903
        %1661 = vmatprep.subr.mxu0 0.0
        %1662 = vmatpush1.xpose.msra.mxu0 %v906
        %1663 = vmatprep.subr.mxu0 0.0
        %1664 = vmatpush1.xpose.msra.mxu0 %v909
        %1665 = vmatprep.subr.mxu0 0.0
        %1666 = vmatpush1.xpose.msra.mxu0 %v912
        %1667 = vmatprep.subr.mxu0 0.0
        %1668 = vmatpush1.xpose.msra.mxu0 %v915
        %1669 = vmatprep.subr.mxu0 0.0
        %1670 = vmatpush1.xpose.msra.mxu0 %v918
        %1671 = vmatprep.subr.mxu0 0.0
        %1672 = vmatpush1.xpose.msra.mxu0 %v921
        %1673 = vmatprep.subr.mxu0 0.0
        %1674 = vmatpush1.xpose.msra.mxu0 %v924
        %1675 = vmatprep.subr.mxu0 0.0
        %1676 = vmatpush1.xpose.msra.mxu0 %v927
        %1677 = vmatprep.subr.mxu0 0.0
        %1678 = vmatpush1.xpose.msra.mxu0 %v930
        %1679 = vmatprep.subr.mxu0 0.0
        %1680 = vmatpush1.xpose.msra.mxu0 %v933
        %1681 = vmatprep.subr.mxu0 0.0
        %1682 = vmatpush1.xpose.msra.mxu0 %v936
        %1683 = vmatprep.mubr.f32.mxu0 0.0
        %1684 = vmatmul.mubr.f32.gmra.mrb[0].mxu0 %v546
        %v1685 = vpop.f32.mrb[0].mxu0
        %v1686 = vadd.f32 %v532, %v1685
        %v1687 = vpop.f32.mrb[0].mxu0
        %v1688 = vadd.f32 %v532, %v1687
        %1689 = vmatprep.mubr.f32.mxu0 0.0
        %1690 = vmatmul.mubr.f32.gmra.mrb[0].mxu0 %v549
        %v1691 = vpop.f32.mrb[0].mxu0
        %v1692 = vadd.f32 %v537, %v1691
        %v1693 = vpop.f32.mrb[0].mxu0
        %v1694 = vadd.f32 %v537, %v1693
        %1695 = vmatprep.mubr.f32.mxu0 0.0
        %1696 = vmatmul.mubr.f32.gmra.mrb[0].mxu0 %v552
        %v1697 = vpop.f32.mrb[0].mxu0
        %v1698 = vadd.f32 %v542, %v1697
        %v1699 = vpop.f32.mrb[0].mxu0
        %v1700 = vadd.f32 %v542, %v1699
        %1701 = vdwg.mxu0
        %1702 = vmatprep.subr.mxu0 0.0
        %1703 = vmatpush1.xpose.msra.mxu0 %v939
        %1704 = vmatprep.subr.mxu0 0.0
        %1705 = vmatpush1.xpose.msra.mxu0 %v942
        %1706 = vmatprep.subr.mxu0 0.0
        %1707 = vmatpush1.xpose.msra.mxu0 %v945
        %1708 = vmatprep.subr.mxu0 0.0
        %1709 = vmatpush1.xpose.msra.mxu0 %v948
        %1710 = vmatprep.subr.mxu0 0.0
        %1711 = vmatpush1.xpose.msra.mxu0 %v951
        %1712 = vmatprep.subr.mxu0 0.0
        %1713 = vmatpush1.xpose.msra.mxu0 %v954
        %1714 = vmatprep.subr.mxu0 0.0
        %1715 = vmatpush1.xpose.msra.mxu0 %v957
        %1716 = vmatprep.subr.mxu0 0.0
        %1717 = vmatpush1.xpose.msra.mxu0 %v960
        %1718 = vmatprep.subr.mxu0 0.0
        %1719 = vmatpush1.xpose.msra.mxu0 %v963
        %1720 = vmatprep.subr.mxu0 0.0
        %1721 = vmatpush1.xpose.msra.mxu0 %v966
        %1722 = vmatprep.subr.mxu0 0.0
        %1723 = vmatpush1.xpose.msra.mxu0 %v969
        %1724 = vmatprep.subr.mxu0 0.0
        %1725 = vmatpush1.xpose.msra.mxu0 %v972
        %1726 = vmatprep.subr.mxu0 0.0
        %1727 = vmatpush1.xpose.msra.mxu0 %v975
        %1728 = vmatprep.subr.mxu0 0.0
        %1729 = vmatpush1.xpose.msra.mxu0 %v978
        %1730 = vmatprep.subr.mxu0 0.0
        %1731 = vmatpush1.xpose.msra.mxu0 %v981
        %1732 = vmatprep.subr.mxu0 0.0
        %1733 = vmatpush1.xpose.msra.mxu0 %v984
        %1734 = vmatprep.subr.mxu0 0.0
        %1735 = vmatpush1.xpose.msra.mxu0 %v987
        %1736 = vmatprep.subr.mxu0 0.0
        %1737 = vmatpush1.xpose.msra.mxu0 %v990
        %1738 = vmatprep.subr.mxu0 0.0
        %1739 = vmatpush1.xpose.msra.mxu0 %v993
        %1740 = vmatprep.subr.mxu0 0.0
        %1741 = vmatpush1.xpose.msra.mxu0 %v996
        %1742 = vmatprep.subr.mxu0 0.0
        %1743 = vmatpush1.xpose.msra.mxu0 %v999
        %1744 = vmatprep.subr.mxu0 0.0
        %1745 = vmatpush1.xpose.msra.mxu0 %v1002
        %1746 = vmatprep.subr.mxu0 0.0
        %1747 = vmatpush1.xpose.msra.mxu0 %v1005
        %1748 = vmatprep.subr.mxu0 0.0
        %1749 = vmatpush1.xpose.msra.mxu0 %v1008
        %1750 = vmatprep.subr.mxu0 0.0
        %1751 = vmatpush1.xpose.msra.mxu0 %v1011
        %1752 = vmatprep.subr.mxu0 0.0
        %1753 = vmatpush1.xpose.msra.mxu0 %v1014
        %1754 = vmatprep.subr.mxu0 0.0
        %1755 = vmatpush1.xpose.msra.mxu0 %v1017
        %1756 = vmatprep.subr.mxu0 0.0
        %1757 = vmatpush1.xpose.msra.mxu0 %v1020
        %1758 = vmatprep.subr.mxu0 0.0
        %1759 = vmatpush1.xpose.msra.mxu0 %v1023
        %1760 = vmatprep.subr.mxu0 0.0
        %1761 = vmatpush1.xpose.msra.mxu0 %v1026
        %1762 = vmatprep.subr.mxu0 0.0
        %1763 = vmatpush1.xpose.msra.mxu0 %v1029
        %1764 = vmatprep.subr.mxu0 0.0
        %1765 = vmatpush1.xpose.msra.mxu0 %v1032
        %1766 = vmatprep.mubr.f32.mxu0 0.0
        %1767 = vmatmul.mubr.f32.gmra.mrb[0].mxu0 %v546
        %v1768 = vpop.f32.mrb[0].mxu0
        %v1769 = vadd.f32 %v532, %v1768
        %v1770 = vpop.f32.mrb[0].mxu0
        %v1771 = vadd.f32 %v532, %v1770
        %1772 = vmatprep.mubr.f32.mxu0 0.0
        %1773 = vmatmul.mubr.f32.gmra.mrb[0].mxu0 %v549
        %v1774 = vpop.f32.mrb[0].mxu0
        %v1775 = vadd.f32 %v537, %v1774
        %v1776 = vpop.f32.mrb[0].mxu0
        %v1777 = vadd.f32 %v537, %v1776
        %1778 = vmatprep.mubr.f32.mxu0 0.0
        %1779 = vmatmul.mubr.f32.gmra.mrb[0].mxu0 %v552
        %v1780 = vpop.f32.mrb[0].mxu0
        %v1781 = vadd.f32 %v542, %v1780
        %v1782 = vpop.f32.mrb[0].mxu0
        %v1783 = vadd.f32 %v542, %v1782
        %1784 = vdwg.mxu0
        %1785 = vmatprep.subr.mxu0 0.0
        %1786 = vmatpush1.xpose.msra.mxu0 %v1035
        %1787 = vmatprep.subr.mxu0 0.0
        %1788 = vmatpush1.xpose.msra.mxu0 %v1038
        %1789 = vmatprep.subr.mxu0 0.0
        %1790 = vmatpush1.xpose.msra.mxu0 %v1041
        %1791 = vmatprep.subr.mxu0 0.0
        %1792 = vmatpush1.xpose.msra.mxu0 %v1044
        %1793 = vmatprep.subr.mxu0 0.0
        %1794 = vmatpush1.xpose.msra.mxu0 %v1047
        %1795 = vmatprep.subr.mxu0 0.0
        %1796 = vmatpush1.xpose.msra.mxu0 %v1050
        %1797 = vmatprep.subr.mxu0 0.0
        %1798 = vmatpush1.xpose.msra.mxu0 %v1053
        %1799 = vmatprep.subr.mxu0 0.0
        %1800 = vmatpush1.xpose.msra.mxu0 %v1056
        %1801 = vmatprep.subr.mxu0 0.0
        %1802 = vmatpush1.xpose.msra.mxu0 %v1059
        %1803 = vmatprep.subr.mxu0 0.0
        %1804 = vmatpush1.xpose.msra.mxu0 %v1062
        %1805 = vmatprep.subr.mxu0 0.0
        %1806 = vmatpush1.xpose.msra.mxu0 %v1065
        %1807 = vmatprep.subr.mxu0 0.0
        %1808 = vmatpush1.xpose.msra.mxu0 %v1068
        %1809 = vmatprep.subr.mxu0 0.0
        %1810 = vmatpush1.xpose.msra.mxu0 %v1071
        %1811 = vmatprep.subr.mxu0 0.0
        %1812 = vmatpush1.xpose.msra.mxu0 %v1074
        %1813 = vmatprep.subr.mxu0 0.0
        %1814 = vmatpush1.xpose.msra.mxu0 %v1077
        %1815 = vmatprep.subr.mxu0 0.0
        %1816 = vmatpush1.xpose.msra.mxu0 %v1080
        %1817 = vmatprep.subr.mxu0 0.0
        %1818 = vmatpush1.xpose.msra.mxu0 %v1083
        %1819 = vmatprep.subr.mxu0 0.0
        %1820 = vmatpush1.xpose.msra.mxu0 %v1086
        %1821 = vmatprep.subr.mxu0 0.0
        %1822 = vmatpush1.xpose.msra.mxu0 %v1089
        %1823 = vmatprep.subr.mxu0 0.0
        %1824 = vmatpush1.xpose.msra.mxu0 %v1092
        %1825 = vmatprep.subr.mxu0 0.0
        %1826 = vmatpush1.xpose.msra.mxu0 %v1095
        %1827 = vmatprep.subr.mxu0 0.0
        %1828 = vmatpush1.xpose.msra.mxu0 %v1098
        %1829 = vmatprep.subr.mxu0 0.0
        %1830 = vmatpush1.xpose.msra.mxu0 %v1101
        %1831 = vmatprep.subr.mxu0 0.0
        %1832 = vmatpush1.xpose.msra.mxu0 %v1104
        %1833 = vmatprep.subr.mxu0 0.0
        %1834 = vmatpush1.xpose.msra.mxu0 %v1107
        %1835 = vmatprep.subr.mxu0 0.0
        %1836 = vmatpush1.xpose.msra.mxu0 %v1110
        %1837 = vmatprep.subr.mxu0 0.0
        %1838 = vmatpush1.xpose.msra.mxu0 %v1113
        %1839 = vmatprep.subr.mxu0 0.0
        %1840 = vmatpush1.xpose.msra.mxu0 %v1116
        %1841 = vmatprep.subr.mxu0 0.0
        %1842 = vmatpush1.xpose.msra.mxu0 %v1119
        %1843 = vmatprep.subr.mxu0 0.0
        %1844 = vmatpush1.xpose.msra.mxu0 %v1122
        %1845 = vmatprep.subr.mxu0 0.0
        %1846 = vmatpush1.xpose.msra.mxu0 %v1125
        %1847 = vmatprep.subr.mxu0 0.0
        %1848 = vmatpush1.xpose.msra.mxu0 %v1128
        %1849 = vmatprep.mubr.f32.mxu0 0.0
        %1850 = vmatmul.mubr.f32.gmra.mrb[0].mxu0 %v546
        %v1851 = vpop.f32.mrb[0].mxu0
        %v1852 = vadd.f32 %v532, %v1851
        %v1853 = vpop.f32.mrb[0].mxu0
        %v1854 = vadd.f32 %v532, %v1853
        %1855 = vmatprep.mubr.f32.mxu0 0.0
        %1856 = vmatmul.mubr.f32.gmra.mrb[0].mxu0 %v549
        %v1857 = vpop.f32.mrb[0].mxu0
        %v1858 = vadd.f32 %v537, %v1857
        %v1859 = vpop.f32.mrb[0].mxu0
        %v1860 = vadd.f32 %v537, %v1859
        %1861 = vmatprep.mubr.f32.mxu0 0.0
        %1862 = vmatmul.mubr.f32.gmra.mrb[0].mxu0 %v552
        %v1863 = vpop.f32.mrb[0].mxu0
        %v1864 = vadd.f32 %v542, %v1863
        %v1865 = vpop.f32.mrb[0].mxu0
        %v1866 = vadd.f32 %v542, %v1865
        %1867 = vdwg.mxu0
        %1868 = vmatprep.subr.mxu0 0.0
        %1869 = vmatpush1.xpose.msra.mxu0 %v1131
        %1870 = vmatprep.subr.mxu0 0.0
        %1871 = vmatpush1.xpose.msra.mxu0 %v1134
        %1872 = vmatprep.subr.mxu0 0.0
        %1873 = vmatpush1.xpose.msra.mxu0 %v1137
        %1874 = vmatprep.subr.mxu0 0.0
        %1875 = vmatpush1.xpose.msra.mxu0 %v1140
        %1876 = vmatprep.subr.mxu0 0.0
        %1877 = vmatpush1.xpose.msra.mxu0 %v1143
        %1878 = vmatprep.subr.mxu0 0.0
        %1879 = vmatpush1.xpose.msra.mxu0 %v1146
        %1880 = vmatprep.subr.mxu0 0.0
        %1881 = vmatpush1.xpose.msra.mxu0 %v1149
        %1882 = vmatprep.subr.mxu0 0.0
        %1883 = vmatpush1.xpose.msra.mxu0 %v1152
        %1884 = vmatprep.subr.mxu0 0.0
        %1885 = vmatpush1.xpose.msra.mxu0 %v1155
        %1886 = vmatprep.subr.mxu0 0.0
        %1887 = vmatpush1.xpose.msra.mxu0 %v1158
        %1888 = vmatprep.subr.mxu0 0.0
        %1889 = vmatpush1.xpose.msra.mxu0 %v1161
        %1890 = vmatprep.subr.mxu0 0.0
        %1891 = vmatpush1.xpose.msra.mxu0 %v1164
        %1892 = vmatprep.subr.mxu0 0.0
        %1893 = vmatpush1.xpose.msra.mxu0 %v1167
        %1894 = vmatprep.subr.mxu0 0.0
        %1895 = vmatpush1.xpose.msra.mxu0 %v1170
        %1896 = vmatprep.subr.mxu0 0.0
        %1897 = vmatpush1.xpose.msra.mxu0 %v1173
        %1898 = vmatprep.subr.mxu0 0.0
        %1899 = vmatpush1.xpose.msra.mxu0 %v1176
        %1900 = vmatprep.subr.mxu0 0.0
        %1901 = vmatpush1.xpose.msra.mxu0 %v1179
        %1902 = vmatprep.subr.mxu0 0.0
        %1903 = vmatpush1.xpose.msra.mxu0 %v1182
        %1904 = vmatprep.subr.mxu0 0.0
        %1905 = vmatpush1.xpose.msra.mxu0 %v1185
        %1906 = vmatprep.subr.mxu0 0.0
        %1907 = vmatpush1.xpose.msra.mxu0 %v1188
        %1908 = vmatprep.subr.mxu0 0.0
        %1909 = vmatpush1.xpose.msra.mxu0 %v1191
        %1910 = vmatprep.subr.mxu0 0.0
        %1911 = vmatpush1.xpose.msra.mxu0 %v1194
        %1912 = vmatprep.subr.mxu0 0.0
        %1913 = vmatpush1.xpose.msra.mxu0 %v1197
        %1914 = vmatprep.subr.mxu0 0.0
        %1915 = vmatpush1.xpose.msra.mxu0 %v1200
        %1916 = vmatprep.subr.mxu0 0.0
        %1917 = vmatpush1.xpose.msra.mxu0 %v1203
        %1918 = vmatprep.subr.mxu0 0.0
        %1919 = vmatpush1.xpose.msra.mxu0 %v1206
        %1920 = vmatprep.subr.mxu0 0.0
        %1921 = vmatpush1.xpose.msra.mxu0 %v1209
        %1922 = vmatprep.subr.mxu0 0.0
        %1923 = vmatpush1.xpose.msra.mxu0 %v1212
        %1924 = vmatprep.subr.mxu0 0.0
        %1925 = vmatpush1.xpose.msra.mxu0 %v1215
        %1926 = vmatprep.subr.mxu0 0.0
        %1927 = vmatpush1.xpose.msra.mxu0 %v1218
        %1928 = vmatprep.subr.mxu0 0.0
        %1929 = vmatpush1.xpose.msra.mxu0 %v1221
        %1930 = vmatprep.subr.mxu0 0.0
        %1931 = vmatpush1.xpose.msra.mxu0 %v1224
        %1932 = vmatprep.mubr.f32.mxu0 0.0
        %1933 = vmatmul.mubr.f32.gmra.mrb[0].mxu0 %v546
        %v1934 = vpop.f32.mrb[0].mxu0
        %v1935 = vadd.f32 %v532, %v1934
        %v1936 = vpop.f32.mrb[0].mxu0
        %v1937 = vadd.f32 %v532, %v1936
        %1938 = vmatprep.mubr.f32.mxu0 0.0
        %1939 = vmatmul.mubr.f32.gmra.mrb[0].mxu0 %v549
        %v1940 = vpop.f32.mrb[0].mxu0
        %v1941 = vadd.f32 %v537, %v1940
        %v1942 = vpop.f32.mrb[0].mxu0
        %v1943 = vadd.f32 %v537, %v1942
        %1944 = vmatprep.mubr.f32.mxu0 0.0
        %1945 = vmatmul.mubr.f32.gmra.mrb[0].mxu0 %v552
        %v1946 = vpop.f32.mrb[0].mxu0
        %v1947 = vadd.f32 %v542, %v1946
        %v1948 = vpop.f32.mrb[0].mxu0
        %v1949 = vadd.f32 %v542, %v1948
        %1950 = vdwg.mxu0
        %1951 = vmatprep.subr.mxu0 0.0
        %1952 = vmatpush1.xpose.msra.mxu0 %v1227
        %1953 = vmatprep.subr.mxu0 0.0
        %1954 = vmatpush1.xpose.msra.mxu0 %v1230
        %1955 = vmatprep.subr.mxu0 0.0
        %1956 = vmatpush1.xpose.msra.mxu0 %v1233
        %1957 = vmatprep.subr.mxu0 0.0
        %1958 = vmatpush1.xpose.msra.mxu0 %v1236
        %1959 = vmatprep.subr.mxu0 0.0
        %1960 = vmatpush1.xpose.msra.mxu0 %v1239
        %1961 = vmatprep.subr.mxu0 0.0
        %1962 = vmatpush1.xpose.msra.mxu0 %v1242
        %1963 = vmatprep.subr.mxu0 0.0
        %1964 = vmatpush1.xpose.msra.mxu0 %v1245
        %1965 = vmatprep.subr.mxu0 0.0
        %1966 = vmatpush1.xpose.msra.mxu0 %v1248
        %1967 = vmatprep.subr.mxu0 0.0
        %1968 = vmatpush1.xpose.msra.mxu0 %v1251
        %1969 = vmatprep.subr.mxu0 0.0
        %1970 = vmatpush1.xpose.msra.mxu0 %v1254
        %1971 = vmatprep.subr.mxu0 0.0
        %1972 = vmatpush1.xpose.msra.mxu0 %v1257
        %1973 = vmatprep.subr.mxu0 0.0
        %1974 = vmatpush1.xpose.msra.mxu0 %v1260
        %1975 = vmatprep.subr.mxu0 0.0
        %1976 = vmatpush1.xpose.msra.mxu0 %v1263
        %1977 = vmatprep.subr.mxu0 0.0
        %1978 = vmatpush1.xpose.msra.mxu0 %v1266
        %1979 = vmatprep.subr.mxu0 0.0
        %1980 = vmatpush1.xpose.msra.mxu0 %v1269
        %1981 = vmatprep.subr.mxu0 0.0
        %1982 = vmatpush1.xpose.msra.mxu0 %v1272
        %1983 = vmatprep.subr.mxu0 0.0
        %1984 = vmatpush1.xpose.msra.mxu0 %v1275
        %1985 = vmatprep.subr.mxu0 0.0
        %1986 = vmatpush1.xpose.msra.mxu0 %v1278
        %1987 = vmatprep.subr.mxu0 0.0
        %1988 = vmatpush1.xpose.msra.mxu0 %v1281
        %1989 = vmatprep.subr.mxu0 0.0
        %1990 = vmatpush1.xpose.msra.mxu0 %v1284
        %1991 = vmatprep.subr.mxu0 0.0
        %1992 = vmatpush1.xpose.msra.mxu0 %v1287
        %1993 = vmatprep.subr.mxu0 0.0
        %1994 = vmatpush1.xpose.msra.mxu0 %v1290
        %1995 = vmatprep.subr.mxu0 0.0
        %1996 = vmatpush1.xpose.msra.mxu0 %v1293
        %1997 = vmatprep.subr.mxu0 0.0
        %1998 = vmatpush1.xpose.msra.mxu0 %v1296
        %1999 = vmatprep.subr.mxu0 0.0
        %2000 = vmatpush1.xpose.msra.mxu0 %v1299
        %2001 = vmatprep.subr.mxu0 0.0
        %2002 = vmatpush1.xpose.msra.mxu0 %v1302
        %2003 = vmatprep.subr.mxu0 0.0
        %2004 = vmatpush1.xpose.msra.mxu0 %v1305
        %2005 = vmatprep.subr.mxu0 0.0
        %2006 = vmatpush1.xpose.msra.mxu0 %v1308
        %2007 = vmatprep.subr.mxu0 0.0
        %2008 = vmatpush1.xpose.msra.mxu0 %v1311
        %2009 = vmatprep.subr.mxu0 0.0
        %2010 = vmatpush1.xpose.msra.mxu0 %v1314
        %2011 = vmatprep.subr.mxu0 0.0
        %2012 = vmatpush1.xpose.msra.mxu0 %v1317
        %2013 = vmatprep.subr.mxu0 0.0
        %2014 = vmatpush1.xpose.msra.mxu0 %v1320
        %2015 = vmatprep.mubr.f32.mxu0 0.0
        %2016 = vmatmul.mubr.f32.gmra.mrb[0].mxu0 %v546
        %v2017 = vpop.f32.mrb[0].mxu0
        %v2018 = vadd.f32 %v532, %v2017
        %v2019 = vpop.f32.mrb[0].mxu0
        %v2020 = vadd.f32 %v532, %v2019
        %2021 = vmatprep.mubr.f32.mxu0 0.0
        %2022 = vmatmul.mubr.f32.gmra.mrb[0].mxu0 %v549
        %v2023 = vpop.f32.mrb[0].mxu0
        %v2024 = vadd.f32 %v537, %v2023
        %v2025 = vpop.f32.mrb[0].mxu0
        %v2026 = vadd.f32 %v537, %v2025
        %2027 = vmatprep.mubr.f32.mxu0 0.0
        %2028 = vmatmul.mubr.f32.gmra.mrb[0].mxu0 %v552
        %v2029 = vpop.f32.mrb[0].mxu0
        %v2030 = vadd.f32 %v542, %v2029
        %v2031 = vpop.f32.mrb[0].mxu0
        %v2032 = vadd.f32 %v542, %v2031
        %2033 = vdwg.mxu0
        %2034 = vmatprep.subr.mxu0 0.0
        %2035 = vmatpush1.xpose.msra.mxu0 %v1323
        %2036 = vmatprep.subr.mxu0 0.0
        %2037 = vmatpush1.xpose.msra.mxu0 %v1326
        %2038 = vmatprep.subr.mxu0 0.0
        %2039 = vmatpush1.xpose.msra.mxu0 %v1329
        %2040 = vmatprep.subr.mxu0 0.0
        %2041 = vmatpush1.xpose.msra.mxu0 %v1332
        %2042 = vmatprep.subr.mxu0 0.0
        %2043 = vmatpush1.xpose.msra.mxu0 %v1335
        %2044 = vmatprep.subr.mxu0 0.0
        %2045 = vmatpush1.xpose.msra.mxu0 %v1338
        %2046 = vmatprep.subr.mxu0 0.0
        %2047 = vmatpush1.xpose.msra.mxu0 %v1341
        %2048 = vmatprep.subr.mxu0 0.0
        %2049 = vmatpush1.xpose.msra.mxu0 %v1344
        %2050 = vmatprep.subr.mxu0 0.0
        %2051 = vmatpush1.xpose.msra.mxu0 %v1347
        %2052 = vmatprep.subr.mxu0 0.0
        %2053 = vmatpush1.xpose.msra.mxu0 %v1350
        %2054 = vmatprep.subr.mxu0 0.0
        %2055 = vmatpush1.xpose.msra.mxu0 %v1353
        %2056 = vmatprep.subr.mxu0 0.0
        %2057 = vmatpush1.xpose.msra.mxu0 %v1356
        %2058 = vmatprep.subr.mxu0 0.0
        %2059 = vmatpush1.xpose.msra.mxu0 %v1359
        %2060 = vmatprep.subr.mxu0 0.0
        %2061 = vmatpush1.xpose.msra.mxu0 %v1362
        %2062 = vmatprep.subr.mxu0 0.0
        %2063 = vmatpush1.xpose.msra.mxu0 %v1365
        %2064 = vmatprep.subr.mxu0 0.0
        %2065 = vmatpush1.xpose.msra.mxu0 %v1368
        %2066 = vmatprep.subr.mxu0 0.0
        %2067 = vmatpush1.xpose.msra.mxu0 0.0
        %2068 = vmatprep.subr.mxu0 0.0
        %2069 = vmatpush1.xpose.msra.mxu0 0.0
        %2070 = vmatprep.subr.mxu0 0.0
        %2071 = vmatpush1.xpose.msra.mxu0 0.0
        %2072 = vmatprep.subr.mxu0 0.0
        %2073 = vmatpush1.xpose.msra.mxu0 0.0
        %2074 = vmatprep.subr.mxu0 0.0
        %2075 = vmatpush1.xpose.msra.mxu0 0.0
        %2076 = vmatprep.subr.mxu0 0.0
        %2077 = vmatpush1.xpose.msra.mxu0 0.0
        %2078 = vmatprep.subr.mxu0 0.0
        %2079 = vmatpush1.xpose.msra.mxu0 0.0
        %2080 = vmatprep.subr.mxu0 0.0
        %2081 = vmatpush1.xpose.msra.mxu0 0.0
        %2082 = vmatprep.subr.mxu0 0.0
        %2083 = vmatpush1.xpose.msra.mxu0 0.0
        %2084 = vmatprep.subr.mxu0 0.0
        %2085 = vmatpush1.xpose.msra.mxu0 0.0
        %2086 = vmatprep.subr.mxu0 0.0
        %2087 = vmatpush1.xpose.msra.mxu0 0.0
        %2088 = vmatprep.subr.mxu0 0.0
        %2089 = vmatpush1.xpose.msra.mxu0 0.0
        %2090 = vmatprep.subr.mxu0 0.0
        %2091 = vmatpush1.xpose.msra.mxu0 0.0
        %2092 = vmatprep.subr.mxu0 0.0
        %2093 = vmatpush1.xpose.msra.mxu0 0.0
        %2094 = vmatprep.subr.mxu0 0.0
        %2095 = vmatpush1.xpose.msra.mxu0 0.0
        %2096 = vmatprep.subr.mxu0 0.0
        %2097 = vmatpush1.xpose.msra.mxu0 0.0
        %2098 = vmatprep.mubr.f32.mxu0 0.0
        %2099 = vmatmul.mubr.f32.gmra.mrb[0].mxu0 %v546
        %v2100 = vpop.f32.mrb[0].mxu0
        %v2101 = vadd.f32 %v532, %v2100
        %v2102 = vpop.f32.mrb[0].mxu0
        %2103 = vmatprep.mubr.f32.mxu0 0.0
        %2104 = vmatmul.mubr.f32.gmra.mrb[0].mxu0 %v549
        %v2105 = vpop.f32.mrb[0].mxu0
        %v2106 = vadd.f32 %v537, %v2105
        %v2107 = vpop.f32.mrb[0].mxu0
        %2108 = vmatprep.mubr.f32.mxu0 0.0
        %2109 = vmatmul.mubr.f32.gmra.mrb[0].mxu0 %v552
        %v2110 = vpop.f32.mrb[0].mxu0
        %v2111 = vadd.f32 %v542, %v2110
        %v2112 = vpop.f32.mrb[0].mxu0
        %2113 = vdwg.mxu0
        %v2114 = vmax.f32 %v1437, 0.0
        %v2115 = vmax.f32 %v1439, 0.0
        %v2116 = vmax.f32 %v1520, 0.0
        %v2117 = vmax.f32 %v1522, 0.0
        %v2118 = vmax.f32 %v1603, 0.0
        %v2119 = vmax.f32 %v1605, 0.0
        %v2120 = vmax.f32 %v1686, 0.0
        %v2121 = vmax.f32 %v1688, 0.0
        %v2122 = vmax.f32 %v1769, 0.0
        %v2123 = vmax.f32 %v1771, 0.0
        %v2124 = vmax.f32 %v1852, 0.0
        %v2125 = vmax.f32 %v1854, 0.0
        %v2126 = vmax.f32 %v1935, 0.0
        %v2127 = vmax.f32 %v1937, 0.0
        %v2128 = vmax.f32 %v2018, 0.0
        %v2129 = vmax.f32 %v2020, 0.0
        %v2130 = vmax.f32 %v2101, 0.0
        %v2131 = vmax.f32 %v1443, 0.0
        %v2132 = vmax.f32 %v1445, 0.0
        %v2133 = vmax.f32 %v1526, 0.0
        %v2134 = vmax.f32 %v1528, 0.0
        %v2135 = vmax.f32 %v1609, 0.0
        %v2136 = vmax.f32 %v1611, 0.0
        %v2137 = vmax.f32 %v1692, 0.0
        %v2138 = vmax.f32 %v1694, 0.0
        %v2139 = vmax.f32 %v1775, 0.0
        %v2140 = vmax.f32 %v1777, 0.0
        %v2141 = vmax.f32 %v1858, 0.0
        %v2142 = vmax.f32 %v1860, 0.0
        %v2143 = vmax.f32 %v1941, 0.0
        %v2144 = vmax.f32 %v1943, 0.0
        %v2145 = vmax.f32 %v2024, 0.0
        %v2146 = vmax.f32 %v2026, 0.0
        %v2147 = vmax.f32 %v2106, 0.0
        %v2148 = vmax.f32 %v1449, 0.0
        %v2149 = vmax.f32 %v1451, 0.0
        %v2150 = vmax.f32 %v1532, 0.0
        %v2151 = vmax.f32 %v1534, 0.0
        %v2152 = vmax.f32 %v1615, 0.0
        %v2153 = vmax.f32 %v1617, 0.0
        %v2154 = vmax.f32 %v1698, 0.0
        %v2155 = vmax.f32 %v1700, 0.0
        %v2156 = vmax.f32 %v1781, 0.0
        %v2157 = vmax.f32 %v1783, 0.0
        %v2158 = vmax.f32 %v1864, 0.0
        %v2159 = vmax.f32 %v1866, 0.0
        %v2160 = vmax.f32 %v1947, 0.0
        %v2161 = vmax.f32 %v1949, 0.0
        %v2162 = vmax.f32 %v2030, 0.0
        %v2163 = vmax.f32 %v2032, 0.0
        %v2164 = vmax.f32 %v2111, 0.0
        %v2165 = vld [vmem:[%s3] sm:$0xff]
        %v2166 = vld [vmem:[%s3 + $0x8] sm:$0xff]
        %v2167 = vld [vmem:[%s3 + $0x10] sm:$0xf]
        %2169 = vset.pattern.permute.xlu0 0
        %2170 = vperm.xlu0 %2169, %v2165
        %v2171 = vpop.permute.xlu0 %2170
        %2174 = vset.pattern.permute.xlu0 0
        %2175 = vperm.xlu0 %2174, %v2166
        %v2176 = vpop.permute.xlu0 %2175
        %2179 = vset.pattern.permute.xlu0 0
        %2180 = vperm.xlu0 %2179, %v2167
        %v2181 = vpop.permute.xlu0 %2180
        %v2183 = vmul.f32 %v2114, %v2171
        %v2184 = vmul.f32 %v2115, %v2171
        %v2185 = vmul.f32 %v2116, %v2171
        %v2186 = vmul.f32 %v2117, %v2171
        %v2187 = vmul.f32 %v2118, %v2171
        %v2188 = vmul.f32 %v2119, %v2171
        %v2189 = vmul.f32 %v2120, %v2171
        %v2190 = vmul.f32 %v2121, %v2171
        %v2191 = vmul.f32 %v2122, %v2171
        %v2192 = vmul.f32 %v2123, %v2171
        %v2193 = vmul.f32 %v2124, %v2171
        %v2194 = vmul.f32 %v2125, %v2171
        %v2195 = vmul.f32 %v2126, %v2171
        %v2196 = vmul.f32 %v2127, %v2171
        %v2197 = vmul.f32 %v2128, %v2171
        %v2198 = vmul.f32 %v2129, %v2171
        %v2199 = vmul.f32 %v2130, %v2171
        %v2200 = vmul.f32 %v2131, %v2176
        %v2201 = vmul.f32 %v2132, %v2176
        %v2202 = vmul.f32 %v2133, %v2176
        %v2203 = vmul.f32 %v2134, %v2176
        %v2204 = vmul.f32 %v2135, %v2176
        %v2205 = vmul.f32 %v2136, %v2176
        %v2206 = vmul.f32 %v2137, %v2176
        %v2207 = vmul.f32 %v2138, %v2176
        %v2208 = vmul.f32 %v2139, %v2176
        %v2209 = vmul.f32 %v2140, %v2176
        %v2210 = vmul.f32 %v2141, %v2176
        %v2211 = vmul.f32 %v2142, %v2176
        %v2212 = vmul.f32 %v2143, %v2176
        %v2213 = vmul.f32 %v2144, %v2176
        %v2214 = vmul.f32 %v2145, %v2176
        %v2215 = vmul.f32 %v2146, %v2176
        %v2216 = vmul.f32 %v2147, %v2176
        %v2217 = vmul.f32 %v2148, %v2181
        %v2218 = vmul.f32 %v2149, %v2181
        %v2219 = vmul.f32 %v2150, %v2181
        %v2220 = vmul.f32 %v2151, %v2181
        %v2221 = vmul.f32 %v2152, %v2181
        %v2222 = vmul.f32 %v2153, %v2181
        %v2223 = vmul.f32 %v2154, %v2181
        %v2224 = vmul.f32 %v2155, %v2181
        %v2225 = vmul.f32 %v2156, %v2181
        %v2226 = vmul.f32 %v2157, %v2181
        %v2227 = vmul.f32 %v2158, %v2181
        %v2228 = vmul.f32 %v2159, %v2181
        %v2229 = vmul.f32 %v2160, %v2181
        %v2230 = vmul.f32 %v2161, %v2181
        %v2231 = vmul.f32 %v2162, %v2181
        %v2232 = vmul.f32 %v2163, %v2181
        %v2233 = vmul.f32 %v2164, %v2181
        %v2234 = vadd.f32 %v2183, %v2200
        %vm2235 = vcmask 1043456
        %v2236 = vsel %vm2235, %v2217, 0.0
        %v2237 = vadd.f32 %v2234, %v2236
        %v2238 = vrot.slane %v2237, 4
        %v2239 = vadd.f32 %v2237, %v2238
        %v2240 = vrot.slane %v2239, 2
        %v2241 = vadd.f32 %v2239, %v2240
        %v2242 = vrot.slane %v2241, 1
        %v2243 = vadd.f32 %v2241, %v2242
        %v2244 = vadd.f32 %v2184, %v2201
        %v2245 = vsel %vm2235, %v2218, 0.0
        %v2246 = vadd.f32 %v2244, %v2245
        %v2247 = vrot.slane %v2246, 4
        %v2248 = vadd.f32 %v2246, %v2247
        %v2249 = vrot.slane %v2248, 2
        %v2250 = vadd.f32 %v2248, %v2249
        %v2251 = vrot.slane %v2250, 1
        %v2252 = vadd.f32 %v2250, %v2251
        %v2253 = vadd.f32 %v2185, %v2202
        %v2254 = vsel %vm2235, %v2219, 0.0
        %v2255 = vadd.f32 %v2253, %v2254
        %v2256 = vrot.slane %v2255, 4
        %v2257 = vadd.f32 %v2255, %v2256
        %v2258 = vrot.slane %v2257, 2
        %v2259 = vadd.f32 %v2257, %v2258
        %v2260 = vrot.slane %v2259, 1
        %v2261 = vadd.f32 %v2259, %v2260
        %v2262 = vadd.f32 %v2186, %v2203
        %v2263 = vsel %vm2235, %v2220, 0.0
        %v2264 = vadd.f32 %v2262, %v2263
        %v2265 = vrot.slane %v2264, 4
        %v2266 = vadd.f32 %v2264, %v2265
        %v2267 = vrot.slane %v2266, 2
        %v2268 = vadd.f32 %v2266, %v2267
        %v2269 = vrot.slane %v2268, 1
        %v2270 = vadd.f32 %v2268, %v2269
        %v2271 = vadd.f32 %v2187, %v2204
        %v2272 = vsel %vm2235, %v2221, 0.0
        %v2273 = vadd.f32 %v2271, %v2272
        %v2274 = vrot.slane %v2273, 4
        %v2275 = vadd.f32 %v2273, %v2274
        %v2276 = vrot.slane %v2275, 2
        %v2277 = vadd.f32 %v2275, %v2276
        %v2278 = vrot.slane %v2277, 1
        %v2279 = vadd.f32 %v2277, %v2278
        %v2280 = vadd.f32 %v2188, %v2205
        %v2281 = vsel %vm2235, %v2222, 0.0
        %v2282 = vadd.f32 %v2280, %v2281
        %v2283 = vrot.slane %v2282, 4
        %v2284 = vadd.f32 %v2282, %v2283
        %v2285 = vrot.slane %v2284, 2
        %v2286 = vadd.f32 %v2284, %v2285
        %v2287 = vrot.slane %v2286, 1
        %v2288 = vadd.f32 %v2286, %v2287
        %v2289 = vadd.f32 %v2189, %v2206
        %v2290 = vsel %vm2235, %v2223, 0.0
        %v2291 = vadd.f32 %v2289, %v2290
        %v2292 = vrot.slane %v2291, 4
        %v2293 = vadd.f32 %v2291, %v2292
        %v2294 = vrot.slane %v2293, 2
        %v2295 = vadd.f32 %v2293, %v2294
        %v2296 = vrot.slane %v2295, 1
        %v2297 = vadd.f32 %v2295, %v2296
        %v2298 = vadd.f32 %v2190, %v2207
        %v2299 = vsel %vm2235, %v2224, 0.0
        %v2300 = vadd.f32 %v2298, %v2299
        %v2301 = vrot.slane %v2300, 4
        %v2302 = vadd.f32 %v2300, %v2301
        %v2303 = vrot.slane %v2302, 2
        %v2304 = vadd.f32 %v2302, %v2303
        %v2305 = vrot.slane %v2304, 1
        %v2306 = vadd.f32 %v2304, %v2305
        %v2307 = vadd.f32 %v2191, %v2208
        %v2308 = vsel %vm2235, %v2225, 0.0
        %v2309 = vadd.f32 %v2307, %v2308
        %v2310 = vrot.slane %v2309, 4
        %v2311 = vadd.f32 %v2309, %v2310
        %v2312 = vrot.slane %v2311, 2
        %v2313 = vadd.f32 %v2311, %v2312
        %v2314 = vrot.slane %v2313, 1
        %v2315 = vadd.f32 %v2313, %v2314
        %v2316 = vadd.f32 %v2192, %v2209
        %v2317 = vsel %vm2235, %v2226, 0.0
        %v2318 = vadd.f32 %v2316, %v2317
        %v2319 = vrot.slane %v2318, 4
        %v2320 = vadd.f32 %v2318, %v2319
        %v2321 = vrot.slane %v2320, 2
        %v2322 = vadd.f32 %v2320, %v2321
        %v2323 = vrot.slane %v2322, 1
        %v2324 = vadd.f32 %v2322, %v2323
        %v2325 = vadd.f32 %v2193, %v2210
        %v2326 = vsel %vm2235, %v2227, 0.0
        %v2327 = vadd.f32 %v2325, %v2326
        %v2328 = vrot.slane %v2327, 4
        %v2329 = vadd.f32 %v2327, %v2328
        %v2330 = vrot.slane %v2329, 2
        %v2331 = vadd.f32 %v2329, %v2330
        %v2332 = vrot.slane %v2331, 1
        %v2333 = vadd.f32 %v2331, %v2332
        %v2334 = vadd.f32 %v2194, %v2211
        %v2335 = vsel %vm2235, %v2228, 0.0
        %v2336 = vadd.f32 %v2334, %v2335
        %v2337 = vrot.slane %v2336, 4
        %v2338 = vadd.f32 %v2336, %v2337
        %v2339 = vrot.slane %v2338, 2
        %v2340 = vadd.f32 %v2338, %v2339
        %v2341 = vrot.slane %v2340, 1
        %v2342 = vadd.f32 %v2340, %v2341
        %v2343 = vadd.f32 %v2195, %v2212
        %v2344 = vsel %vm2235, %v2229, 0.0
        %v2345 = vadd.f32 %v2343, %v2344
        %v2346 = vrot.slane %v2345, 4
        %v2347 = vadd.f32 %v2345, %v2346
        %v2348 = vrot.slane %v2347, 2
        %v2349 = vadd.f32 %v2347, %v2348
        %v2350 = vrot.slane %v2349, 1
        %v2351 = vadd.f32 %v2349, %v2350
        %v2352 = vadd.f32 %v2196, %v2213
        %v2353 = vsel %vm2235, %v2230, 0.0
        %v2354 = vadd.f32 %v2352, %v2353
        %v2355 = vrot.slane %v2354, 4
        %v2356 = vadd.f32 %v2354, %v2355
        %v2357 = vrot.slane %v2356, 2
        %v2358 = vadd.f32 %v2356, %v2357
        %v2359 = vrot.slane %v2358, 1
        %v2360 = vadd.f32 %v2358, %v2359
        %v2361 = vadd.f32 %v2197, %v2214
        %v2362 = vsel %vm2235, %v2231, 0.0
        %v2363 = vadd.f32 %v2361, %v2362
        %v2364 = vrot.slane %v2363, 4
        %v2365 = vadd.f32 %v2363, %v2364
        %v2366 = vrot.slane %v2365, 2
        %v2367 = vadd.f32 %v2365, %v2366
        %v2368 = vrot.slane %v2367, 1
        %v2369 = vadd.f32 %v2367, %v2368
        %v2370 = vadd.f32 %v2198, %v2215
        %v2371 = vsel %vm2235, %v2232, 0.0
        %v2372 = vadd.f32 %v2370, %v2371
        %v2373 = vrot.slane %v2372, 4
        %v2374 = vadd.f32 %v2372, %v2373
        %v2375 = vrot.slane %v2374, 2
        %v2376 = vadd.f32 %v2374, %v2375
        %v2377 = vrot.slane %v2376, 1
        %v2378 = vadd.f32 %v2376, %v2377
        %v2379 = vadd.f32 %v2199, %v2216
        %v2380 = vsel %vm2235, %v2233, 0.0
        %v2381 = vadd.f32 %v2379, %v2380
        %v2382 = vrot.slane %v2381, 4
        %v2383 = vadd.f32 %v2381, %v2382
        %v2384 = vrot.slane %v2383, 2
        %v2385 = vadd.f32 %v2383, %v2384
        %v2386 = vrot.slane %v2385, 1
        %v2387 = vadd.f32 %v2385, %v2386
        %s2388 = sld [smem:[#allocation2]]
        %v2389 = vstv %s2388
        %v2390 = vadd.f32 %v2243, %v2389
        %v2391 = vadd.f32 %v2252, %v2389
        %v2392 = vadd.f32 %v2261, %v2389
        %v2393 = vadd.f32 %v2270, %v2389
        %v2394 = vadd.f32 %v2279, %v2389
        %v2395 = vadd.f32 %v2288, %v2389
        %v2396 = vadd.f32 %v2297, %v2389
        %v2397 = vadd.f32 %v2306, %v2389
        %v2398 = vadd.f32 %v2315, %v2389
        %v2399 = vadd.f32 %v2324, %v2389
        %v2400 = vadd.f32 %v2333, %v2389
        %v2401 = vadd.f32 %v2342, %v2389
        %v2402 = vadd.f32 %v2351, %v2389
        %v2403 = vadd.f32 %v2360, %v2389
        %v2404 = vadd.f32 %v2369, %v2389
        %v2405 = vadd.f32 %v2378, %v2389
        %v2406 = vadd.f32 %v2387, %v2389
        %v2424 = vcombine.low %v2390, %v2391
        %v2425 = vcombine.low %v2392, %v2393
        %v2426 = vcombine.low %v2394, %v2395
        %v2427 = vcombine.low %v2396, %v2397
        %v2429 = vunpack.c.l.s4 1966171168
        %v2430 = vunpack.c.0.s8 %v2429
        %v2431 = vlaneseq
        %v2432 = vshrl.u32 %v2431, 7
        %v2433 = vsub.s32 %v2430, %v2432
        %v2434 = vrot.slane %v2424, %v2433
        %v2436 = vunpack.c.l.s4 1966171168
        %v2437 = vunpack.c.0.s8 %v2436
        %v2438 = vlaneseq
        %v2439 = vshrl.u32 %v2438, 7
        %v2440 = vsub.s32 %v2437, %v2439
        %v2441 = vrot.slane %v2425, %v2440
        %v2443 = vunpack.c.l.s4 1966171168
        %v2444 = vunpack.c.0.s8 %v2443
        %v2445 = vlaneseq
        %v2446 = vshrl.u32 %v2445, 7
        %v2447 = vsub.s32 %v2444, %v2446
        %v2448 = vrot.slane %v2426, %v2447
        %v2450 = vunpack.c.l.s4 1966171168
        %v2451 = vunpack.c.0.s8 %v2450
        %v2452 = vlaneseq
        %v2453 = vshrl.u32 %v2452, 7
        %v2454 = vsub.s32 %v2451, %v2453
        %v2455 = vrot.slane %v2427, %v2454
        %v2456 = vcombine.low %v2434, %v2441
        %v2457 = vcombine.low %v2448, %v2455
        %v2459 = vunpack.c.l.s4 1966171168
        %v2460 = vunpack.c.0.s8 %v2459
        %v2461 = vlaneseq
        %v2462 = vshrl.u32 %v2461, 7
        %v2463 = vsub.s32 %v2460, %v2462
        %v2464 = vrot.slane %v2456, %v2463
        %v2466 = vunpack.c.l.s4 1966171168
        %v2467 = vunpack.c.0.s8 %v2466
        %v2468 = vlaneseq
        %v2469 = vshrl.u32 %v2468, 7
        %v2470 = vsub.s32 %v2467, %v2469
        %v2471 = vrot.slane %v2457, %v2470
        %v2472 = vcombine.low %v2464, %v2471
        %v2473 = vcombine.low %v2398, %v2399
        %v2474 = vcombine.low %v2400, %v2401
        %v2475 = vcombine.low %v2402, %v2403
        %v2476 = vcombine.low %v2404, %v2405
        %v2478 = vunpack.c.l.s4 1966171168
        %v2479 = vunpack.c.0.s8 %v2478
        %v2480 = vlaneseq
        %v2481 = vshrl.u32 %v2480, 7
        %v2482 = vsub.s32 %v2479, %v2481
        %v2483 = vrot.slane %v2473, %v2482
        %v2485 = vunpack.c.l.s4 1966171168
        %v2486 = vunpack.c.0.s8 %v2485
        %v2487 = vlaneseq
        %v2488 = vshrl.u32 %v2487, 7
        %v2489 = vsub.s32 %v2486, %v2488
        %v2490 = vrot.slane %v2474, %v2489
        %v2492 = vunpack.c.l.s4 1966171168
        %v2493 = vunpack.c.0.s8 %v2492
        %v2494 = vlaneseq
        %v2495 = vshrl.u32 %v2494, 7
        %v2496 = vsub.s32 %v2493, %v2495
        %v2497 = vrot.slane %v2475, %v2496
        %v2499 = vunpack.c.l.s4 1966171168
        %v2500 = vunpack.c.0.s8 %v2499
        %v2501 = vlaneseq
        %v2502 = vshrl.u32 %v2501, 7
        %v2503 = vsub.s32 %v2500, %v2502
        %v2504 = vrot.slane %v2476, %v2503
        %v2505 = vcombine.low %v2483, %v2490
        %v2506 = vcombine.low %v2497, %v2504
        %v2508 = vunpack.c.l.s4 1966171168
        %v2509 = vunpack.c.0.s8 %v2508
        %v2510 = vlaneseq
        %v2511 = vshrl.u32 %v2510, 7
        %v2512 = vsub.s32 %v2509, %v2511
        %v2513 = vrot.slane %v2505, %v2512
        %v2515 = vunpack.c.l.s4 1966171168
        %v2516 = vunpack.c.0.s8 %v2515
        %v2517 = vlaneseq
        %v2518 = vshrl.u32 %v2517, 7
        %v2519 = vsub.s32 %v2516, %v2518
        %v2520 = vrot.slane %v2506, %v2519
        %v2521 = vcombine.low %v2513, %v2520
        %v2523 = vunpack.c.l.s4 1966171168
        %v2524 = vunpack.c.0.s8 %v2523
        %v2525 = vlaneseq
        %v2526 = vshrl.u32 %v2525, 7
        %v2527 = vsub.s32 %v2524, %v2526
        %v2528 = vrot.slane %v2406, %v2527
        %v2530 = vunpack.c.l.s4 1966171168
        %v2531 = vunpack.c.0.s8 %v2530
        %v2532 = vlaneseq
        %v2533 = vshrl.u32 %v2532, 7
        %v2534 = vsub.s32 %v2531, %v2533
        %v2535 = vrot.slane %v2528, %v2534
        %2539 = vst [vmem:[%s231] sm:$0xff] %v2472
        %2540 = vst [vmem:[%s231 + $0x8] sm:$0xff] %v2521
        %v2541 = vlaneseq
        %vm2542 = vcmp.ge.s32.totalorder %v2541, 0
        %vm2543 = vcmp.lt.s32.totalorder %v2541, 128
        %vm2544 = vmand %vm2542, %vm2543
        %2545 = vst.msk [vmem:[%s231 + $0x10] sm:$0x1] %vm2544, %v2535
        %s2546 = sand.u32 %s138, 1
        %s2547 = scalar_lea.sflag [#allocation4], %s2546
        %s2548 = sand.u32 %s138, 1
        %s2549 = smul.addr %s2548, 17
        %s2550 = scalar_lea.vmem [#allocation3], %s2549
        // Predicated region
        $region41: #{qnetwork_forward.1} parent=39 // pred_check
          %p2551 = pneg %p148
        $region42: #{qnetwork_forward.1} parent=39 // pred_check_branch
          %2553 = sbr.rel (%p2551) target = $region44
        $region43: #{qnetwork_forward.1} parent=39 // pred_region
          %s2554 = smul.u32 17, %s20
          %s2555 = ssub.s32 33, %s2554
          %p2556 = scmp.lt.s32.totalorder %s2555, 17
          %s2557 = scalar_select %p2556, %s2555, 17
          %s2558 = smul.u32 16, %s2557
          %s2560 = ssub.s32 272, %s2558
          %2561 = vsyncadd %s2547, %s2560
          %p2562 = scmp.ne.s32.totalorder 0, %s2558
          %s2563 = smul.addr %s2554, 16
          %s2564 = scalar_lea.hbm %s5, %s2563
          %s2565 = sshll.u32 %s2557, 4
          %s2566 = sshll.u32 %s2550, 4
          %s2567 = int_to_ptr.vmem [resolvable:$true] %s2566
          %2569 = dma.vmem_to_hbm [thread:$0]  (%p2562), %s2567, %s2565, %s2564, %s2547
        $region44: #{qnetwork_forward.1} parent=39 // pred_fallthru
          _
      $region40: #{qnetwork_forward.1} parent=5 // pred_fallthru
        _
      %p2570 = scmp.le.s32.totalorder 2, %s15
      // Predicated region
      $region45: #{qnetwork_forward.1} parent=5 // pred_check
        %p2571 = pneg %p2570
      $region46: #{qnetwork_forward.1} parent=5 // pred_check_branch
        %2573 = sbr.rel (%p2571) target = $region48
      $region47: #{qnetwork_forward.1} parent=5 // pred_region
        %s2574 = ssub.s32 %s15, 2
        // Predicated region
        $region49: #{qnetwork_forward.1} parent=47 // pred_check
          %p2575 = pneg %p154
        $region50: #{qnetwork_forward.1} parent=47 // pred_check_branch
          %2577 = sbr.rel (%p2575) target = $region52
        $region51: #{qnetwork_forward.1} parent=47 // pred_region
          %s2578 = sand.u32 %s139, 1
          %s2579 = scalar_lea.sflag [#allocation4], %s2578
          %s2580 = sand.u32 %s139, 1
          %s2581 = smul.addr %s2580, 17
          %s2582 = scalar_lea.vmem [#allocation3], %s2581
          %2583 = dma.done %s2579, 272
        $region52: #{qnetwork_forward.1} parent=47 // pred_fallthru
          _
      $region48: #{qnetwork_forward.1} parent=5 // pred_fallthru
        _
    $region6: #{qnetwork_forward.1} parent=1 // loop_footer
      %s19 = sadd.s32 1, %s15
    $region7: #{qnetwork_forward.1} parent=1 // loop_footer_branch
      %14 = sbr.rel target = $region3
    $region8: #{qnetwork_forward.1} parent=1 // loop_exit
      _
    %2584 = vsyncpa [#allocation4], 1
    %s2585 = scalar_lea.sflag [#allocation4], 1
    %2586 = vsyncpa %s2585, 1

</llo_original>
